<compile_context>
chip_gen: v6e
topology: v6e:2x2x1
jax: 0.10.0
libtpu: 0.0.40
codegen_flags: <defaults>
</compile_context>

<pallas_src>
import jax
import jax.numpy as jnp
from jax.experimental import pallas as pl
from jax.experimental.pallas import tpu as pltpu


def question_encoder_kernel(ids_ref, table_hbm, emb_ref, feat_ref, copy_sems):
    """Row gather (HBM -> VMEM DMA per token) + L2 normalize (dim=-1).

    ids_ref   : (BS,)   int32  token ids, SMEM
    table_hbm : (V, D)  f32    precomputed (embed_table @ w_proj), left in HBM (pl.ANY)
    emb_ref   : (BS, D) f32    L2-normalized word embeddings (output, VMEM)
    feat_ref  : (BS, D) f32    VMEM scratch for the gathered rows
    copy_sems : (BS,)   DMA semaphores, one per row copy
    """
    BS = emb_ref.shape[0]

    # Issue all row DMAs first (they overlap), then wait.  Each copy moves only D*4 bytes,
    # so total traffic is BS*D*4 regardless of vocab size.
    copies = []
    for i in range(BS):  # static unroll; BS is small and known at trace time
        row_id = ids_ref[i]
        cp = pltpu.make_async_copy(
            table_hbm.at[pl.ds(row_id, 1), :],
            feat_ref.at[pl.ds(i, 1), :],
            copy_sems.at[i],
        )
        cp.start()
        copies.append(cp)
    for cp in copies:
        cp.wait()

    # F.normalize(x, p=2, dim=-1): x / max(||x||, 1e-12)  ==  x * rsqrt(max(||x||^2, 1e-24)).
    # rsqrt executes in the otherwise-idle EUP slot; the axis=-1 reduce uses the XLU.
    feat = feat_ref[...]
    sq_norm = jnp.sum(feat * feat, axis=-1, keepdims=True)      # (BS, 1)
    inv_norm = jax.lax.rsqrt(jnp.maximum(sq_norm, 1e-24))       # eps**2 clamp
    emb_ref[...] = feat * inv_norm


def init_question_encoder_params(embed_table, w_proj):
    """One-time weight prep, hoisted out of the per-call forward path.

    Folds embedding lookup + projection into a single table: since every output row depends on
    exactly one vocab row, (gather . project) == gather from (embed_table @ w_proj).
    """
    return embed_table.astype(jnp.float32) @ w_proj.astype(jnp.float32)   # (V, D)


def question_encoder_forward(input_ids, proj_table, attention_mask):
    """Pallas wrapper. Returns (word_embeddings, key_padding_mask)."""
    B, S = input_ids.shape
    V, D = proj_table.shape

    # Free metadata reshape only — no per-call weight prep, padding, or casts of parameters here.
    ids_flat = input_ids.reshape(B * S).astype(jnp.int32)

    emb = pl.pallas_call(
        question_encoder_kernel,
        out_shape=jax.ShapeDtypeStruct((B * S, D), jnp.float32),
        in_specs=[
            pl.BlockSpec(memory_space=pltpu.MemorySpace.SMEM),   # token ids -> SMEM scalars
            pl.BlockSpec(memory_space=pl.ANY),                   # table stays in HBM; rows are DMA'd
        ],
        out_specs=pl.BlockSpec(memory_space=pltpu.MemorySpace.VMEM),
        scratch_shapes=[
            pltpu.VMEM((B * S, D), jnp.float32),                 # gathered rows
            pltpu.SemaphoreType.DMA((B * S,)),                   # one DMA sem per row
        ],
    )(ids_flat, proj_table)

    word_embeddings = emb.reshape(B, S, D)

    # key_padding_mask = 1 - attention_mask.float(): trivial (B, S) elementwise op on a
    # sub-128-lane layout — cheaper as plain jnp than as a masked kernel store.
    key_padding_mask = 1.0 - attention_mask.astype(jnp.float32)
    return word_embeddings, key_padding_mask


if __name__ == "__main__":
    # Small deterministic setup consistent with the module hyperparams:
    #   embed_dim=32, max_seq_length=8, batch=2, CLIP hidden H=32, vocab=64.
    B, S, H, D, VOCAB = 2, 8, 32, 32, 64
    key = jax.random.PRNGKey(0)
    k_emb, k_proj, k_ids = jax.random.split(key, 3)

    # Deterministic "CLIP" parameters (synthetic; no checkpoint load).
    embed_table = jax.random.normal(k_emb, (VOCAB, H), dtype=jnp.float32) * 0.02
    w_proj = jax.random.normal(k_proj, (H, D), dtype=jnp.float32) * 0.05

    # One-time init: fold embedding + projection into a single lookup table.
    proj_table = jax.block_until_ready(init_question_encoder_params(embed_table, w_proj))

    # Tokenizer output (glue): token ids + attention mask with right-padding.
    # Ids are guaranteed in-range [0, VOCAB); out-of-range ids would be an OOB DMA.
    # TODO(synk): real CLIPTokenizer string processing / decoded word_tokens (python strings)
    # have no Pallas equivalent; token ids are synthesized here.
    input_ids = jax.random.randint(k_ids, (B, S), 0, VOCAB)
    lengths = jnp.array([5, 7], dtype=jnp.int32)   # tokens per example, rest is padding
    attention_mask = (jnp.arange(S)[None, :] < lengths[:, None]).astype(jnp.float32)

    word_embeddings, key_padding_mask = question_encoder_forward(
        input_ids, proj_table, attention_mask)
    jax.block_until_ready((word_embeddings, key_padding_mask))

    # src_mask is built (but not returned) by the PyTorch forward; mirror in glue.
    src_mask = jnp.triu(jnp.full((S, S), -jnp.inf), k=1)

    # Pure-JAX reference against the ORIGINAL semantics: gather -> project -> F.normalize.
    ref_gathered = jnp.take(embed_table, input_ids.reshape(-1), axis=0)   # (B*S, H)
    ref_feat = ref_gathered @ w_proj
    ref_norm = jnp.maximum(jnp.linalg.norm(ref_feat, axis=-1, keepdims=True), 1e-12)
    ref_emb = (ref_feat / ref_norm).reshape(B, S, D)

    assert jnp.allclose(word_embeddings, ref_emb, atol=1e-5, rtol=1e-3)
    assert jnp.allclose(key_padding_mask, 1.0 - attention_mask)

    print("KERNEL_OK")
</pallas_src>

<mosaic_0001>
module attributes {stable_mosaic.version = 11 : i64} {
  func.func @question_encoder_kernel(%arg0: memref<16xi32, #tpu.memory_space<smem>>, %arg1: memref<64x32xf32, #tpu.memory_space<any>>, %arg2: memref<16x32xf32, #tpu.memory_space<vmem>>, %arg3: memref<16x32xf32, #tpu.memory_space<vmem>>, %arg4: memref<16x!tpu.dma_semaphore, #tpu.memory_space<semaphore_mem>>) attributes {dimension_semantics = [], scalar_prefetch = 0 : i64, scratch_operands = 2 : i64, tpu.core_type = #tpu.core_type<tc>} {
    %c0 = arith.constant 0 : index
    %0 = memref.load %arg0[%c0] : memref<16xi32, #tpu.memory_space<smem>>
    %c0_i32 = arith.constant 0 : i32
    %c0_i32_0 = arith.constant 0 : i32
    %1 = tpu.memref_slice %arg1[%0, %c0_i32_0] : memref<64x32xf32, #tpu.memory_space<any>> -> memref<1x32xf32, #tpu.memory_space<any>>
    %c0_i32_1 = arith.constant 0 : i32
    %c0_i32_2 = arith.constant 0 : i32
    %2 = tpu.memref_slice %arg3[%c0_i32_1, %c0_i32_2] : memref<16x32xf32, #tpu.memory_space<vmem>> -> memref<1x32xf32, #tpu.memory_space<vmem>>
    %3 = tpu.memref_slice %arg4[%c0_i32] : memref<16x!tpu.dma_semaphore, #tpu.memory_space<semaphore_mem>> -> memref<1x!tpu.dma_semaphore, #tpu.memory_space<semaphore_mem>>
    %4 = tpu.memref_squeeze %3 : memref<1x!tpu.dma_semaphore, #tpu.memory_space<semaphore_mem>> -> memref<!tpu.dma_semaphore, #tpu.memory_space<semaphore_mem>>
    tpu.enqueue_dma source(%1 : memref<1x32xf32, #tpu.memory_space<any>>) target(%2 : memref<1x32xf32, #tpu.memory_space<vmem>>) target_semaphore(%4 : memref<!tpu.dma_semaphore, #tpu.memory_space<semaphore_mem>>)
    %c1 = arith.constant 1 : index
    %5 = memref.load %arg0[%c1] : memref<16xi32, #tpu.memory_space<smem>>
    %c1_i32 = arith.constant 1 : i32
    %c0_i32_3 = arith.constant 0 : i32
    %6 = tpu.memref_slice %arg1[%5, %c0_i32_3] : memref<64x32xf32, #tpu.memory_space<any>> -> memref<1x32xf32, #tpu.memory_space<any>>
    %c1_i32_4 = arith.constant 1 : i32
    %c0_i32_5 = arith.constant 0 : i32
    %7 = tpu.memref_slice %arg3[%c1_i32_4, %c0_i32_5] : memref<16x32xf32, #tpu.memory_space<vmem>> -> memref<1x32xf32, #tpu.memory_space<vmem>>
    %8 = tpu.memref_slice %arg4[%c1_i32] : memref<16x!tpu.dma_semaphore, #tpu.memory_space<semaphore_mem>> -> memref<1x!tpu.dma_semaphore, #tpu.memory_space<semaphore_mem>>
    %9 = tpu.memref_squeeze %8 : memref<1x!tpu.dma_semaphore, #tpu.memory_space<semaphore_mem>> -> memref<!tpu.dma_semaphore, #tpu.memory_space<semaphore_mem>>
    tpu.enqueue_dma source(%6 : memref<1x32xf32, #tpu.memory_space<any>>) target(%7 : memref<1x32xf32, #tpu.memory_space<vmem>>) target_semaphore(%9 : memref<!tpu.dma_semaphore, #tpu.memory_space<semaphore_mem>>)
    %c2 = arith.constant 2 : index
    %10 = memref.load %arg0[%c2] : memref<16xi32, #tpu.memory_space<smem>>
    %c2_i32 = arith.constant 2 : i32
    %c0_i32_6 = arith.constant 0 : i32
    %11 = tpu.memref_slice %arg1[%10, %c0_i32_6] : memref<64x32xf32, #tpu.memory_space<any>> -> memref<1x32xf32, #tpu.memory_space<any>>
    %c2_i32_7 = arith.constant 2 : i32
    %c0_i32_8 = arith.constant 0 : i32
    %12 = tpu.memref_slice %arg3[%c2_i32_7, %c0_i32_8] : memref<16x32xf32, #tpu.memory_space<vmem>> -> memref<1x32xf32, #tpu.memory_space<vmem>>
    %13 = tpu.memref_slice %arg4[%c2_i32] : memref<16x!tpu.dma_semaphore, #tpu.memory_space<semaphore_mem>> -> memref<1x!tpu.dma_semaphore, #tpu.memory_space<semaphore_mem>>
    %14 = tpu.memref_squeeze %13 : memref<1x!tpu.dma_semaphore, #tpu.memory_space<semaphore_mem>> -> memref<!tpu.dma_semaphore, #tpu.memory_space<semaphore_mem>>
    tpu.enqueue_dma source(%11 : memref<1x32xf32, #tpu.memory_space<any>>) target(%12 : memref<1x32xf32, #tpu.memory_space<vmem>>) target_semaphore(%14 : memref<!tpu.dma_semaphore, #tpu.memory_space<semaphore_mem>>)
    %c3 = arith.constant 3 : index
    %15 = memref.load %arg0[%c3] : memref<16xi32, #tpu.memory_space<smem>>
    %c3_i32 = arith.constant 3 : i32
    %c0_i32_9 = arith.constant 0 : i32
    %16 = tpu.memref_slice %arg1[%15, %c0_i32_9] : memref<64x32xf32, #tpu.memory_space<any>> -> memref<1x32xf32, #tpu.memory_space<any>>
    %c3_i32_10 = arith.constant 3 : i32
    %c0_i32_11 = arith.constant 0 : i32
    %17 = tpu.memref_slice %arg3[%c3_i32_10, %c0_i32_11] : memref<16x32xf32, #tpu.memory_space<vmem>> -> memref<1x32xf32, #tpu.memory_space<vmem>>
    %18 = tpu.memref_slice %arg4[%c3_i32] : memref<16x!tpu.dma_semaphore, #tpu.memory_space<semaphore_mem>> -> memref<1x!tpu.dma_semaphore, #tpu.memory_space<semaphore_mem>>
    %19 = tpu.memref_squeeze %18 : memref<1x!tpu.dma_semaphore, #tpu.memory_space<semaphore_mem>> -> memref<!tpu.dma_semaphore, #tpu.memory_space<semaphore_mem>>
    tpu.enqueue_dma source(%16 : memref<1x32xf32, #tpu.memory_space<any>>) target(%17 : memref<1x32xf32, #tpu.memory_space<vmem>>) target_semaphore(%19 : memref<!tpu.dma_semaphore, #tpu.memory_space<semaphore_mem>>)
    %c4 = arith.constant 4 : index
    %20 = memref.load %arg0[%c4] : memref<16xi32, #tpu.memory_space<smem>>
    %c4_i32 = arith.constant 4 : i32
    %c0_i32_12 = arith.constant 0 : i32
    %21 = tpu.memref_slice %arg1[%20, %c0_i32_12] : memref<64x32xf32, #tpu.memory_space<any>> -> memref<1x32xf32, #tpu.memory_space<any>>
    %c4_i32_13 = arith.constant 4 : i32
    %c0_i32_14 = arith.constant 0 : i32
    %22 = tpu.memref_slice %arg3[%c4_i32_13, %c0_i32_14] : memref<16x32xf32, #tpu.memory_space<vmem>> -> memref<1x32xf32, #tpu.memory_space<vmem>>
    %23 = tpu.memref_slice %arg4[%c4_i32] : memref<16x!tpu.dma_semaphore, #tpu.memory_space<semaphore_mem>> -> memref<1x!tpu.dma_semaphore, #tpu.memory_space<semaphore_mem>>
    %24 = tpu.memref_squeeze %23 : memref<1x!tpu.dma_semaphore, #tpu.memory_space<semaphore_mem>> -> memref<!tpu.dma_semaphore, #tpu.memory_space<semaphore_mem>>
    tpu.enqueue_dma source(%21 : memref<1x32xf32, #tpu.memory_space<any>>) target(%22 : memref<1x32xf32, #tpu.memory_space<vmem>>) target_semaphore(%24 : memref<!tpu.dma_semaphore, #tpu.memory_space<semaphore_mem>>)
    %c5 = arith.constant 5 : index
    %25 = memref.load %arg0[%c5] : memref<16xi32, #tpu.memory_space<smem>>
    %c5_i32 = arith.constant 5 : i32
    %c0_i32_15 = arith.constant 0 : i32
    %26 = tpu.memref_slice %arg1[%25, %c0_i32_15] : memref<64x32xf32, #tpu.memory_space<any>> -> memref<1x32xf32, #tpu.memory_space<any>>
    %c5_i32_16 = arith.constant 5 : i32
    %c0_i32_17 = arith.constant 0 : i32
    %27 = tpu.memref_slice %arg3[%c5_i32_16, %c0_i32_17] : memref<16x32xf32, #tpu.memory_space<vmem>> -> memref<1x32xf32, #tpu.memory_space<vmem>>
    %28 = tpu.memref_slice %arg4[%c5_i32] : memref<16x!tpu.dma_semaphore, #tpu.memory_space<semaphore_mem>> -> memref<1x!tpu.dma_semaphore, #tpu.memory_space<semaphore_mem>>
    %29 = tpu.memref_squeeze %28 : memref<1x!tpu.dma_semaphore, #tpu.memory_space<semaphore_mem>> -> memref<!tpu.dma_semaphore, #tpu.memory_space<semaphore_mem>>
    tpu.enqueue_dma source(%26 : memref<1x32xf32, #tpu.memory_space<any>>) target(%27 : memref<1x32xf32, #tpu.memory_space<vmem>>) target_semaphore(%29 : memref<!tpu.dma_semaphore, #tpu.memory_space<semaphore_mem>>)
    %c6 = arith.constant 6 : index
    %30 = memref.load %arg0[%c6] : memref<16xi32, #tpu.memory_space<smem>>
    %c6_i32 = arith.constant 6 : i32
    %c0_i32_18 = arith.constant 0 : i32
    %31 = tpu.memref_slice %arg1[%30, %c0_i32_18] : memref<64x32xf32, #tpu.memory_space<any>> -> memref<1x32xf32, #tpu.memory_space<any>>
    %c6_i32_19 = arith.constant 6 : i32
    %c0_i32_20 = arith.constant 0 : i32
    %32 = tpu.memref_slice %arg3[%c6_i32_19, %c0_i32_20] : memref<16x32xf32, #tpu.memory_space<vmem>> -> memref<1x32xf32, #tpu.memory_space<vmem>>
    %33 = tpu.memref_slice %arg4[%c6_i32] : memref<16x!tpu.dma_semaphore, #tpu.memory_space<semaphore_mem>> -> memref<1x!tpu.dma_semaphore, #tpu.memory_space<semaphore_mem>>
    %34 = tpu.memref_squeeze %33 : memref<1x!tpu.dma_semaphore, #tpu.memory_space<semaphore_mem>> -> memref<!tpu.dma_semaphore, #tpu.memory_space<semaphore_mem>>
    tpu.enqueue_dma source(%31 : memref<1x32xf32, #tpu.memory_space<any>>) target(%32 : memref<1x32xf32, #tpu.memory_space<vmem>>) target_semaphore(%34 : memref<!tpu.dma_semaphore, #tpu.memory_space<semaphore_mem>>)
    %c7 = arith.constant 7 : index
    %35 = memref.load %arg0[%c7] : memref<16xi32, #tpu.memory_space<smem>>
    %c7_i32 = arith.constant 7 : i32
    %c0_i32_21 = arith.constant 0 : i32
    %36 = tpu.memref_slice %arg1[%35, %c0_i32_21] : memref<64x32xf32, #tpu.memory_space<any>> -> memref<1x32xf32, #tpu.memory_space<any>>
    %c7_i32_22 = arith.constant 7 : i32
    %c0_i32_23 = arith.constant 0 : i32
    %37 = tpu.memref_slice %arg3[%c7_i32_22, %c0_i32_23] : memref<16x32xf32, #tpu.memory_space<vmem>> -> memref<1x32xf32, #tpu.memory_space<vmem>>
    %38 = tpu.memref_slice %arg4[%c7_i32] : memref<16x!tpu.dma_semaphore, #tpu.memory_space<semaphore_mem>> -> memref<1x!tpu.dma_semaphore, #tpu.memory_space<semaphore_mem>>
    %39 = tpu.memref_squeeze %38 : memref<1x!tpu.dma_semaphore, #tpu.memory_space<semaphore_mem>> -> memref<!tpu.dma_semaphore, #tpu.memory_space<semaphore_mem>>
    tpu.enqueue_dma source(%36 : memref<1x32xf32, #tpu.memory_space<any>>) target(%37 : memref<1x32xf32, #tpu.memory_space<vmem>>) target_semaphore(%39 : memref<!tpu.dma_semaphore, #tpu.memory_space<semaphore_mem>>)
    %c8 = arith.constant 8 : index
    %40 = memref.load %arg0[%c8] : memref<16xi32, #tpu.memory_space<smem>>
    %c8_i32 = arith.constant 8 : i32
    %c0_i32_24 = arith.constant 0 : i32
    %41 = tpu.memref_slice %arg1[%40, %c0_i32_24] : memref<64x32xf32, #tpu.memory_space<any>> -> memref<1x32xf32, #tpu.memory_space<any>>
    %c8_i32_25 = arith.constant 8 : i32
    %c0_i32_26 = arith.constant 0 : i32
    %42 = tpu.memref_slice %arg3[%c8_i32_25, %c0_i32_26] : memref<16x32xf32, #tpu.memory_space<vmem>> -> memref<1x32xf32, #tpu.memory_space<vmem>>
    %43 = tpu.memref_slice %arg4[%c8_i32] : memref<16x!tpu.dma_semaphore, #tpu.memory_space<semaphore_mem>> -> memref<1x!tpu.dma_semaphore, #tpu.memory_space<semaphore_mem>>
    %44 = tpu.memref_squeeze %43 : memref<1x!tpu.dma_semaphore, #tpu.memory_space<semaphore_mem>> -> memref<!tpu.dma_semaphore, #tpu.memory_space<semaphore_mem>>
    tpu.enqueue_dma source(%41 : memref<1x32xf32, #tpu.memory_space<any>>) target(%42 : memref<1x32xf32, #tpu.memory_space<vmem>>) target_semaphore(%44 : memref<!tpu.dma_semaphore, #tpu.memory_space<semaphore_mem>>)
    %c9 = arith.constant 9 : index
    %45 = memref.load %arg0[%c9] : memref<16xi32, #tpu.memory_space<smem>>
    %c9_i32 = arith.constant 9 : i32
    %c0_i32_27 = arith.constant 0 : i32
    %46 = tpu.memref_slice %arg1[%45, %c0_i32_27] : memref<64x32xf32, #tpu.memory_space<any>> -> memref<1x32xf32, #tpu.memory_space<any>>
    %c9_i32_28 = arith.constant 9 : i32
    %c0_i32_29 = arith.constant 0 : i32
    %47 = tpu.memref_slice %arg3[%c9_i32_28, %c0_i32_29] : memref<16x32xf32, #tpu.memory_space<vmem>> -> memref<1x32xf32, #tpu.memory_space<vmem>>
    %48 = tpu.memref_slice %arg4[%c9_i32] : memref<16x!tpu.dma_semaphore, #tpu.memory_space<semaphore_mem>> -> memref<1x!tpu.dma_semaphore, #tpu.memory_space<semaphore_mem>>
    %49 = tpu.memref_squeeze %48 : memref<1x!tpu.dma_semaphore, #tpu.memory_space<semaphore_mem>> -> memref<!tpu.dma_semaphore, #tpu.memory_space<semaphore_mem>>
    tpu.enqueue_dma source(%46 : memref<1x32xf32, #tpu.memory_space<any>>) target(%47 : memref<1x32xf32, #tpu.memory_space<vmem>>) target_semaphore(%49 : memref<!tpu.dma_semaphore, #tpu.memory_space<semaphore_mem>>)
    %c10 = arith.constant 10 : index
    %50 = memref.load %arg0[%c10] : memref<16xi32, #tpu.memory_space<smem>>
    %c10_i32 = arith.constant 10 : i32
    %c0_i32_30 = arith.constant 0 : i32
    %51 = tpu.memref_slice %arg1[%50, %c0_i32_30] : memref<64x32xf32, #tpu.memory_space<any>> -> memref<1x32xf32, #tpu.memory_space<any>>
    %c10_i32_31 = arith.constant 10 : i32
    %c0_i32_32 = arith.constant 0 : i32
    %52 = tpu.memref_slice %arg3[%c10_i32_31, %c0_i32_32] : memref<16x32xf32, #tpu.memory_space<vmem>> -> memref<1x32xf32, #tpu.memory_space<vmem>>
    %53 = tpu.memref_slice %arg4[%c10_i32] : memref<16x!tpu.dma_semaphore, #tpu.memory_space<semaphore_mem>> -> memref<1x!tpu.dma_semaphore, #tpu.memory_space<semaphore_mem>>
    %54 = tpu.memref_squeeze %53 : memref<1x!tpu.dma_semaphore, #tpu.memory_space<semaphore_mem>> -> memref<!tpu.dma_semaphore, #tpu.memory_space<semaphore_mem>>
    tpu.enqueue_dma source(%51 : memref<1x32xf32, #tpu.memory_space<any>>) target(%52 : memref<1x32xf32, #tpu.memory_space<vmem>>) target_semaphore(%54 : memref<!tpu.dma_semaphore, #tpu.memory_space<semaphore_mem>>)
    %c11 = arith.constant 11 : index
    %55 = memref.load %arg0[%c11] : memref<16xi32, #tpu.memory_space<smem>>
    %c11_i32 = arith.constant 11 : i32
    %c0_i32_33 = arith.constant 0 : i32
    %56 = tpu.memref_slice %arg1[%55, %c0_i32_33] : memref<64x32xf32, #tpu.memory_space<any>> -> memref<1x32xf32, #tpu.memory_space<any>>
    %c11_i32_34 = arith.constant 11 : i32
    %c0_i32_35 = arith.constant 0 : i32
    %57 = tpu.memref_slice %arg3[%c11_i32_34, %c0_i32_35] : memref<16x32xf32, #tpu.memory_space<vmem>> -> memref<1x32xf32, #tpu.memory_space<vmem>>
    %58 = tpu.memref_slice %arg4[%c11_i32] : memref<16x!tpu.dma_semaphore, #tpu.memory_space<semaphore_mem>> -> memref<1x!tpu.dma_semaphore, #tpu.memory_space<semaphore_mem>>
    %59 = tpu.memref_squeeze %58 : memref<1x!tpu.dma_semaphore, #tpu.memory_space<semaphore_mem>> -> memref<!tpu.dma_semaphore, #tpu.memory_space<semaphore_mem>>
    tpu.enqueue_dma source(%56 : memref<1x32xf32, #tpu.memory_space<any>>) target(%57 : memref<1x32xf32, #tpu.memory_space<vmem>>) target_semaphore(%59 : memref<!tpu.dma_semaphore, #tpu.memory_space<semaphore_mem>>)
    %c12 = arith.constant 12 : index
    %60 = memref.load %arg0[%c12] : memref<16xi32, #tpu.memory_space<smem>>
    %c12_i32 = arith.constant 12 : i32
    %c0_i32_36 = arith.constant 0 : i32
    %61 = tpu.memref_slice %arg1[%60, %c0_i32_36] : memref<64x32xf32, #tpu.memory_space<any>> -> memref<1x32xf32, #tpu.memory_space<any>>
    %c12_i32_37 = arith.constant 12 : i32
    %c0_i32_38 = arith.constant 0 : i32
    %62 = tpu.memref_slice %arg3[%c12_i32_37, %c0_i32_38] : memref<16x32xf32, #tpu.memory_space<vmem>> -> memref<1x32xf32, #tpu.memory_space<vmem>>
    %63 = tpu.memref_slice %arg4[%c12_i32] : memref<16x!tpu.dma_semaphore, #tpu.memory_space<semaphore_mem>> -> memref<1x!tpu.dma_semaphore, #tpu.memory_space<semaphore_mem>>
    %64 = tpu.memref_squeeze %63 : memref<1x!tpu.dma_semaphore, #tpu.memory_space<semaphore_mem>> -> memref<!tpu.dma_semaphore, #tpu.memory_space<semaphore_mem>>
    tpu.enqueue_dma source(%61 : memref<1x32xf32, #tpu.memory_space<any>>) target(%62 : memref<1x32xf32, #tpu.memory_space<vmem>>) target_semaphore(%64 : memref<!tpu.dma_semaphore, #tpu.memory_space<semaphore_mem>>)
    %c13 = arith.constant 13 : index
    %65 = memref.load %arg0[%c13] : memref<16xi32, #tpu.memory_space<smem>>
    %c13_i32 = arith.constant 13 : i32
    %c0_i32_39 = arith.constant 0 : i32
    %66 = tpu.memref_slice %arg1[%65, %c0_i32_39] : memref<64x32xf32, #tpu.memory_space<any>> -> memref<1x32xf32, #tpu.memory_space<any>>
    %c13_i32_40 = arith.constant 13 : i32
    %c0_i32_41 = arith.constant 0 : i32
    %67 = tpu.memref_slice %arg3[%c13_i32_40, %c0_i32_41] : memref<16x32xf32, #tpu.memory_space<vmem>> -> memref<1x32xf32, #tpu.memory_space<vmem>>
    %68 = tpu.memref_slice %arg4[%c13_i32] : memref<16x!tpu.dma_semaphore, #tpu.memory_space<semaphore_mem>> -> memref<1x!tpu.dma_semaphore, #tpu.memory_space<semaphore_mem>>
    %69 = tpu.memref_squeeze %68 : memref<1x!tpu.dma_semaphore, #tpu.memory_space<semaphore_mem>> -> memref<!tpu.dma_semaphore, #tpu.memory_space<semaphore_mem>>
    tpu.enqueue_dma source(%66 : memref<1x32xf32, #tpu.memory_space<any>>) target(%67 : memref<1x32xf32, #tpu.memory_space<vmem>>) target_semaphore(%69 : memref<!tpu.dma_semaphore, #tpu.memory_space<semaphore_mem>>)
    %c14 = arith.constant 14 : index
    %70 = memref.load %arg0[%c14] : memref<16xi32, #tpu.memory_space<smem>>
    %c14_i32 = arith.constant 14 : i32
    %c0_i32_42 = arith.constant 0 : i32
    %71 = tpu.memref_slice %arg1[%70, %c0_i32_42] : memref<64x32xf32, #tpu.memory_space<any>> -> memref<1x32xf32, #tpu.memory_space<any>>
    %c14_i32_43 = arith.constant 14 : i32
    %c0_i32_44 = arith.constant 0 : i32
    %72 = tpu.memref_slice %arg3[%c14_i32_43, %c0_i32_44] : memref<16x32xf32, #tpu.memory_space<vmem>> -> memref<1x32xf32, #tpu.memory_space<vmem>>
    %73 = tpu.memref_slice %arg4[%c14_i32] : memref<16x!tpu.dma_semaphore, #tpu.memory_space<semaphore_mem>> -> memref<1x!tpu.dma_semaphore, #tpu.memory_space<semaphore_mem>>
    %74 = tpu.memref_squeeze %73 : memref<1x!tpu.dma_semaphore, #tpu.memory_space<semaphore_mem>> -> memref<!tpu.dma_semaphore, #tpu.memory_space<semaphore_mem>>
    tpu.enqueue_dma source(%71 : memref<1x32xf32, #tpu.memory_space<any>>) target(%72 : memref<1x32xf32, #tpu.memory_space<vmem>>) target_semaphore(%74 : memref<!tpu.dma_semaphore, #tpu.memory_space<semaphore_mem>>)
    %c15 = arith.constant 15 : index
    %75 = memref.load %arg0[%c15] : memref<16xi32, #tpu.memory_space<smem>>
    %c15_i32 = arith.constant 15 : i32
    %c0_i32_45 = arith.constant 0 : i32
    %76 = tpu.memref_slice %arg1[%75, %c0_i32_45] : memref<64x32xf32, #tpu.memory_space<any>> -> memref<1x32xf32, #tpu.memory_space<any>>
    %c15_i32_46 = arith.constant 15 : i32
    %c0_i32_47 = arith.constant 0 : i32
    %77 = tpu.memref_slice %arg3[%c15_i32_46, %c0_i32_47] : memref<16x32xf32, #tpu.memory_space<vmem>> -> memref<1x32xf32, #tpu.memory_space<vmem>>
    %78 = tpu.memref_slice %arg4[%c15_i32] : memref<16x!tpu.dma_semaphore, #tpu.memory_space<semaphore_mem>> -> memref<1x!tpu.dma_semaphore, #tpu.memory_space<semaphore_mem>>
    %79 = tpu.memref_squeeze %78 : memref<1x!tpu.dma_semaphore, #tpu.memory_space<semaphore_mem>> -> memref<!tpu.dma_semaphore, #tpu.memory_space<semaphore_mem>>
    tpu.enqueue_dma source(%76 : memref<1x32xf32, #tpu.memory_space<any>>) target(%77 : memref<1x32xf32, #tpu.memory_space<vmem>>) target_semaphore(%79 : memref<!tpu.dma_semaphore, #tpu.memory_space<semaphore_mem>>)
    %c0_i32_48 = arith.constant 0 : i32
    %c0_i32_49 = arith.constant 0 : i32
    %80 = tpu.memref_slice %arg1[%0, %c0_i32_49] : memref<64x32xf32, #tpu.memory_space<any>> -> memref<1x32xf32, #tpu.memory_space<any>>
    %c0_i32_50 = arith.constant 0 : i32
    %c0_i32_51 = arith.constant 0 : i32
    %81 = tpu.memref_slice %arg3[%c0_i32_50, %c0_i32_51] : memref<16x32xf32, #tpu.memory_space<vmem>> -> memref<1x32xf32, #tpu.memory_space<vmem>>
    %82 = tpu.memref_slice %arg4[%c0_i32_48] : memref<16x!tpu.dma_semaphore, #tpu.memory_space<semaphore_mem>> -> memref<1x!tpu.dma_semaphore, #tpu.memory_space<semaphore_mem>>
    %83 = tpu.memref_squeeze %82 : memref<1x!tpu.dma_semaphore, #tpu.memory_space<semaphore_mem>> -> memref<!tpu.dma_semaphore, #tpu.memory_space<semaphore_mem>>
    tpu.wait_dma2 semaphore(%83 : memref<!tpu.dma_semaphore, #tpu.memory_space<semaphore_mem>>) src(%80 : memref<1x32xf32, #tpu.memory_space<any>>) dst(%81 : memref<1x32xf32, #tpu.memory_space<vmem>>)
    %c1_i32_52 = arith.constant 1 : i32
    %c0_i32_53 = arith.constant 0 : i32
    %84 = tpu.memref_slice %arg1[%5, %c0_i32_53] : memref<64x32xf32, #tpu.memory_space<any>> -> memref<1x32xf32, #tpu.memory_space<any>>
    %c1_i32_54 = arith.constant 1 : i32
    %c0_i32_55 = arith.constant 0 : i32
    %85 = tpu.memref_slice %arg3[%c1_i32_54, %c0_i32_55] : memref<16x32xf32, #tpu.memory_space<vmem>> -> memref<1x32xf32, #tpu.memory_space<vmem>>
    %86 = tpu.memref_slice %arg4[%c1_i32_52] : memref<16x!tpu.dma_semaphore, #tpu.memory_space<semaphore_mem>> -> memref<1x!tpu.dma_semaphore, #tpu.memory_space<semaphore_mem>>
    %87 = tpu.memref_squeeze %86 : memref<1x!tpu.dma_semaphore, #tpu.memory_space<semaphore_mem>> -> memref<!tpu.dma_semaphore, #tpu.memory_space<semaphore_mem>>
    tpu.wait_dma2 semaphore(%87 : memref<!tpu.dma_semaphore, #tpu.memory_space<semaphore_mem>>) src(%84 : memref<1x32xf32, #tpu.memory_space<any>>) dst(%85 : memref<1x32xf32, #tpu.memory_space<vmem>>)
    %c2_i32_56 = arith.constant 2 : i32
    %c0_i32_57 = arith.constant 0 : i32
    %88 = tpu.memref_slice %arg1[%10, %c0_i32_57] : memref<64x32xf32, #tpu.memory_space<any>> -> memref<1x32xf32, #tpu.memory_space<any>>
    %c2_i32_58 = arith.constant 2 : i32
    %c0_i32_59 = arith.constant 0 : i32
    %89 = tpu.memref_slice %arg3[%c2_i32_58, %c0_i32_59] : memref<16x32xf32, #tpu.memory_space<vmem>> -> memref<1x32xf32, #tpu.memory_space<vmem>>
    %90 = tpu.memref_slice %arg4[%c2_i32_56] : memref<16x!tpu.dma_semaphore, #tpu.memory_space<semaphore_mem>> -> memref<1x!tpu.dma_semaphore, #tpu.memory_space<semaphore_mem>>
    %91 = tpu.memref_squeeze %90 : memref<1x!tpu.dma_semaphore, #tpu.memory_space<semaphore_mem>> -> memref<!tpu.dma_semaphore, #tpu.memory_space<semaphore_mem>>
    tpu.wait_dma2 semaphore(%91 : memref<!tpu.dma_semaphore, #tpu.memory_space<semaphore_mem>>) src(%88 : memref<1x32xf32, #tpu.memory_space<any>>) dst(%89 : memref<1x32xf32, #tpu.memory_space<vmem>>)
    %c3_i32_60 = arith.constant 3 : i32
    %c0_i32_61 = arith.constant 0 : i32
    %92 = tpu.memref_slice %arg1[%15, %c0_i32_61] : memref<64x32xf32, #tpu.memory_space<any>> -> memref<1x32xf32, #tpu.memory_space<any>>
    %c3_i32_62 = arith.constant 3 : i32
    %c0_i32_63 = arith.constant 0 : i32
    %93 = tpu.memref_slice %arg3[%c3_i32_62, %c0_i32_63] : memref<16x32xf32, #tpu.memory_space<vmem>> -> memref<1x32xf32, #tpu.memory_space<vmem>>
    %94 = tpu.memref_slice %arg4[%c3_i32_60] : memref<16x!tpu.dma_semaphore, #tpu.memory_space<semaphore_mem>> -> memref<1x!tpu.dma_semaphore, #tpu.memory_space<semaphore_mem>>
    %95 = tpu.memref_squeeze %94 : memref<1x!tpu.dma_semaphore, #tpu.memory_space<semaphore_mem>> -> memref<!tpu.dma_semaphore, #tpu.memory_space<semaphore_mem>>
    tpu.wait_dma2 semaphore(%95 : memref<!tpu.dma_semaphore, #tpu.memory_space<semaphore_mem>>) src(%92 : memref<1x32xf32, #tpu.memory_space<any>>) dst(%93 : memref<1x32xf32, #tpu.memory_space<vmem>>)
    %c4_i32_64 = arith.constant 4 : i32
    %c0_i32_65 = arith.constant 0 : i32
    %96 = tpu.memref_slice %arg1[%20, %c0_i32_65] : memref<64x32xf32, #tpu.memory_space<any>> -> memref<1x32xf32, #tpu.memory_space<any>>
    %c4_i32_66 = arith.constant 4 : i32
    %c0_i32_67 = arith.constant 0 : i32
    %97 = tpu.memref_slice %arg3[%c4_i32_66, %c0_i32_67] : memref<16x32xf32, #tpu.memory_space<vmem>> -> memref<1x32xf32, #tpu.memory_space<vmem>>
    %98 = tpu.memref_slice %arg4[%c4_i32_64] : memref<16x!tpu.dma_semaphore, #tpu.memory_space<semaphore_mem>> -> memref<1x!tpu.dma_semaphore, #tpu.memory_space<semaphore_mem>>
    %99 = tpu.memref_squeeze %98 : memref<1x!tpu.dma_semaphore, #tpu.memory_space<semaphore_mem>> -> memref<!tpu.dma_semaphore, #tpu.memory_space<semaphore_mem>>
    tpu.wait_dma2 semaphore(%99 : memref<!tpu.dma_semaphore, #tpu.memory_space<semaphore_mem>>) src(%96 : memref<1x32xf32, #tpu.memory_space<any>>) dst(%97 : memref<1x32xf32, #tpu.memory_space<vmem>>)
    %c5_i32_68 = arith.constant 5 : i32
    %c0_i32_69 = arith.constant 0 : i32
    %100 = tpu.memref_slice %arg1[%25, %c0_i32_69] : memref<64x32xf32, #tpu.memory_space<any>> -> memref<1x32xf32, #tpu.memory_space<any>>
    %c5_i32_70 = arith.constant 5 : i32
    %c0_i32_71 = arith.constant 0 : i32
    %101 = tpu.memref_slice %arg3[%c5_i32_70, %c0_i32_71] : memref<16x32xf32, #tpu.memory_space<vmem>> -> memref<1x32xf32, #tpu.memory_space<vmem>>
    %102 = tpu.memref_slice %arg4[%c5_i32_68] : memref<16x!tpu.dma_semaphore, #tpu.memory_space<semaphore_mem>> -> memref<1x!tpu.dma_semaphore, #tpu.memory_space<semaphore_mem>>
    %103 = tpu.memref_squeeze %102 : memref<1x!tpu.dma_semaphore, #tpu.memory_space<semaphore_mem>> -> memref<!tpu.dma_semaphore, #tpu.memory_space<semaphore_mem>>
    tpu.wait_dma2 semaphore(%103 : memref<!tpu.dma_semaphore, #tpu.memory_space<semaphore_mem>>) src(%100 : memref<1x32xf32, #tpu.memory_space<any>>) dst(%101 : memref<1x32xf32, #tpu.memory_space<vmem>>)
    %c6_i32_72 = arith.constant 6 : i32
    %c0_i32_73 = arith.constant 0 : i32
    %104 = tpu.memref_slice %arg1[%30, %c0_i32_73] : memref<64x32xf32, #tpu.memory_space<any>> -> memref<1x32xf32, #tpu.memory_space<any>>
    %c6_i32_74 = arith.constant 6 : i32
    %c0_i32_75 = arith.constant 0 : i32
    %105 = tpu.memref_slice %arg3[%c6_i32_74, %c0_i32_75] : memref<16x32xf32, #tpu.memory_space<vmem>> -> memref<1x32xf32, #tpu.memory_space<vmem>>
    %106 = tpu.memref_slice %arg4[%c6_i32_72] : memref<16x!tpu.dma_semaphore, #tpu.memory_space<semaphore_mem>> -> memref<1x!tpu.dma_semaphore, #tpu.memory_space<semaphore_mem>>
    %107 = tpu.memref_squeeze %106 : memref<1x!tpu.dma_semaphore, #tpu.memory_space<semaphore_mem>> -> memref<!tpu.dma_semaphore, #tpu.memory_space<semaphore_mem>>
    tpu.wait_dma2 semaphore(%107 : memref<!tpu.dma_semaphore, #tpu.memory_space<semaphore_mem>>) src(%104 : memref<1x32xf32, #tpu.memory_space<any>>) dst(%105 : memref<1x32xf32, #tpu.memory_space<vmem>>)
    %c7_i32_76 = arith.constant 7 : i32
    %c0_i32_77 = arith.constant 0 : i32
    %108 = tpu.memref_slice %arg1[%35, %c0_i32_77] : memref<64x32xf32, #tpu.memory_space<any>> -> memref<1x32xf32, #tpu.memory_space<any>>
    %c7_i32_78 = arith.constant 7 : i32
    %c0_i32_79 = arith.constant 0 : i32
    %109 = tpu.memref_slice %arg3[%c7_i32_78, %c0_i32_79] : memref<16x32xf32, #tpu.memory_space<vmem>> -> memref<1x32xf32, #tpu.memory_space<vmem>>
    %110 = tpu.memref_slice %arg4[%c7_i32_76] : memref<16x!tpu.dma_semaphore, #tpu.memory_space<semaphore_mem>> -> memref<1x!tpu.dma_semaphore, #tpu.memory_space<semaphore_mem>>
    %111 = tpu.memref_squeeze %110 : memref<1x!tpu.dma_semaphore, #tpu.memory_space<semaphore_mem>> -> memref<!tpu.dma_semaphore, #tpu.memory_space<semaphore_mem>>
    tpu.wait_dma2 semaphore(%111 : memref<!tpu.dma_semaphore, #tpu.memory_space<semaphore_mem>>) src(%108 : memref<1x32xf32, #tpu.memory_space<any>>) dst(%109 : memref<1x32xf32, #tpu.memory_space<vmem>>)
    %c8_i32_80 = arith.constant 8 : i32
    %c0_i32_81 = arith.constant 0 : i32
    %112 = tpu.memref_slice %arg1[%40, %c0_i32_81] : memref<64x32xf32, #tpu.memory_space<any>> -> memref<1x32xf32, #tpu.memory_space<any>>
    %c8_i32_82 = arith.constant 8 : i32
    %c0_i32_83 = arith.constant 0 : i32
    %113 = tpu.memref_slice %arg3[%c8_i32_82, %c0_i32_83] : memref<16x32xf32, #tpu.memory_space<vmem>> -> memref<1x32xf32, #tpu.memory_space<vmem>>
    %114 = tpu.memref_slice %arg4[%c8_i32_80] : memref<16x!tpu.dma_semaphore, #tpu.memory_space<semaphore_mem>> -> memref<1x!tpu.dma_semaphore, #tpu.memory_space<semaphore_mem>>
    %115 = tpu.memref_squeeze %114 : memref<1x!tpu.dma_semaphore, #tpu.memory_space<semaphore_mem>> -> memref<!tpu.dma_semaphore, #tpu.memory_space<semaphore_mem>>
    tpu.wait_dma2 semaphore(%115 : memref<!tpu.dma_semaphore, #tpu.memory_space<semaphore_mem>>) src(%112 : memref<1x32xf32, #tpu.memory_space<any>>) dst(%113 : memref<1x32xf32, #tpu.memory_space<vmem>>)
    %c9_i32_84 = arith.constant 9 : i32
    %c0_i32_85 = arith.constant 0 : i32
    %116 = tpu.memref_slice %arg1[%45, %c0_i32_85] : memref<64x32xf32, #tpu.memory_space<any>> -> memref<1x32xf32, #tpu.memory_space<any>>
    %c9_i32_86 = arith.constant 9 : i32
    %c0_i32_87 = arith.constant 0 : i32
    %117 = tpu.memref_slice %arg3[%c9_i32_86, %c0_i32_87] : memref<16x32xf32, #tpu.memory_space<vmem>> -> memref<1x32xf32, #tpu.memory_space<vmem>>
    %118 = tpu.memref_slice %arg4[%c9_i32_84] : memref<16x!tpu.dma_semaphore, #tpu.memory_space<semaphore_mem>> -> memref<1x!tpu.dma_semaphore, #tpu.memory_space<semaphore_mem>>
    %119 = tpu.memref_squeeze %118 : memref<1x!tpu.dma_semaphore, #tpu.memory_space<semaphore_mem>> -> memref<!tpu.dma_semaphore, #tpu.memory_space<semaphore_mem>>
    tpu.wait_dma2 semaphore(%119 : memref<!tpu.dma_semaphore, #tpu.memory_space<semaphore_mem>>) src(%116 : memref<1x32xf32, #tpu.memory_space<any>>) dst(%117 : memref<1x32xf32, #tpu.memory_space<vmem>>)
    %c10_i32_88 = arith.constant 10 : i32
    %c0_i32_89 = arith.constant 0 : i32
    %120 = tpu.memref_slice %arg1[%50, %c0_i32_89] : memref<64x32xf32, #tpu.memory_space<any>> -> memref<1x32xf32, #tpu.memory_space<any>>
    %c10_i32_90 = arith.constant 10 : i32
    %c0_i32_91 = arith.constant 0 : i32
    %121 = tpu.memref_slice %arg3[%c10_i32_90, %c0_i32_91] : memref<16x32xf32, #tpu.memory_space<vmem>> -> memref<1x32xf32, #tpu.memory_space<vmem>>
    %122 = tpu.memref_slice %arg4[%c10_i32_88] : memref<16x!tpu.dma_semaphore, #tpu.memory_space<semaphore_mem>> -> memref<1x!tpu.dma_semaphore, #tpu.memory_space<semaphore_mem>>
    %123 = tpu.memref_squeeze %122 : memref<1x!tpu.dma_semaphore, #tpu.memory_space<semaphore_mem>> -> memref<!tpu.dma_semaphore, #tpu.memory_space<semaphore_mem>>
    tpu.wait_dma2 semaphore(%123 : memref<!tpu.dma_semaphore, #tpu.memory_space<semaphore_mem>>) src(%120 : memref<1x32xf32, #tpu.memory_space<any>>) dst(%121 : memref<1x32xf32, #tpu.memory_space<vmem>>)
    %c11_i32_92 = arith.constant 11 : i32
    %c0_i32_93 = arith.constant 0 : i32
    %124 = tpu.memref_slice %arg1[%55, %c0_i32_93] : memref<64x32xf32, #tpu.memory_space<any>> -> memref<1x32xf32, #tpu.memory_space<any>>
    %c11_i32_94 = arith.constant 11 : i32
    %c0_i32_95 = arith.constant 0 : i32
    %125 = tpu.memref_slice %arg3[%c11_i32_94, %c0_i32_95] : memref<16x32xf32, #tpu.memory_space<vmem>> -> memref<1x32xf32, #tpu.memory_space<vmem>>
    %126 = tpu.memref_slice %arg4[%c11_i32_92] : memref<16x!tpu.dma_semaphore, #tpu.memory_space<semaphore_mem>> -> memref<1x!tpu.dma_semaphore, #tpu.memory_space<semaphore_mem>>
    %127 = tpu.memref_squeeze %126 : memref<1x!tpu.dma_semaphore, #tpu.memory_space<semaphore_mem>> -> memref<!tpu.dma_semaphore, #tpu.memory_space<semaphore_mem>>
    tpu.wait_dma2 semaphore(%127 : memref<!tpu.dma_semaphore, #tpu.memory_space<semaphore_mem>>) src(%124 : memref<1x32xf32, #tpu.memory_space<any>>) dst(%125 : memref<1x32xf32, #tpu.memory_space<vmem>>)
    %c12_i32_96 = arith.constant 12 : i32
    %c0_i32_97 = arith.constant 0 : i32
    %128 = tpu.memref_slice %arg1[%60, %c0_i32_97] : memref<64x32xf32, #tpu.memory_space<any>> -> memref<1x32xf32, #tpu.memory_space<any>>
    %c12_i32_98 = arith.constant 12 : i32
    %c0_i32_99 = arith.constant 0 : i32
    %129 = tpu.memref_slice %arg3[%c12_i32_98, %c0_i32_99] : memref<16x32xf32, #tpu.memory_space<vmem>> -> memref<1x32xf32, #tpu.memory_space<vmem>>
    %130 = tpu.memref_slice %arg4[%c12_i32_96] : memref<16x!tpu.dma_semaphore, #tpu.memory_space<semaphore_mem>> -> memref<1x!tpu.dma_semaphore, #tpu.memory_space<semaphore_mem>>
    %131 = tpu.memref_squeeze %130 : memref<1x!tpu.dma_semaphore, #tpu.memory_space<semaphore_mem>> -> memref<!tpu.dma_semaphore, #tpu.memory_space<semaphore_mem>>
    tpu.wait_dma2 semaphore(%131 : memref<!tpu.dma_semaphore, #tpu.memory_space<semaphore_mem>>) src(%128 : memref<1x32xf32, #tpu.memory_space<any>>) dst(%129 : memref<1x32xf32, #tpu.memory_space<vmem>>)
    %c13_i32_100 = arith.constant 13 : i32
    %c0_i32_101 = arith.constant 0 : i32
    %132 = tpu.memref_slice %arg1[%65, %c0_i32_101] : memref<64x32xf32, #tpu.memory_space<any>> -> memref<1x32xf32, #tpu.memory_space<any>>
    %c13_i32_102 = arith.constant 13 : i32
    %c0_i32_103 = arith.constant 0 : i32
    %133 = tpu.memref_slice %arg3[%c13_i32_102, %c0_i32_103] : memref<16x32xf32, #tpu.memory_space<vmem>> -> memref<1x32xf32, #tpu.memory_space<vmem>>
    %134 = tpu.memref_slice %arg4[%c13_i32_100] : memref<16x!tpu.dma_semaphore, #tpu.memory_space<semaphore_mem>> -> memref<1x!tpu.dma_semaphore, #tpu.memory_space<semaphore_mem>>
    %135 = tpu.memref_squeeze %134 : memref<1x!tpu.dma_semaphore, #tpu.memory_space<semaphore_mem>> -> memref<!tpu.dma_semaphore, #tpu.memory_space<semaphore_mem>>
    tpu.wait_dma2 semaphore(%135 : memref<!tpu.dma_semaphore, #tpu.memory_space<semaphore_mem>>) src(%132 : memref<1x32xf32, #tpu.memory_space<any>>) dst(%133 : memref<1x32xf32, #tpu.memory_space<vmem>>)
    %c14_i32_104 = arith.constant 14 : i32
    %c0_i32_105 = arith.constant 0 : i32
    %136 = tpu.memref_slice %arg1[%70, %c0_i32_105] : memref<64x32xf32, #tpu.memory_space<any>> -> memref<1x32xf32, #tpu.memory_space<any>>
    %c14_i32_106 = arith.constant 14 : i32
    %c0_i32_107 = arith.constant 0 : i32
    %137 = tpu.memref_slice %arg3[%c14_i32_106, %c0_i32_107] : memref<16x32xf32, #tpu.memory_space<vmem>> -> memref<1x32xf32, #tpu.memory_space<vmem>>
    %138 = tpu.memref_slice %arg4[%c14_i32_104] : memref<16x!tpu.dma_semaphore, #tpu.memory_space<semaphore_mem>> -> memref<1x!tpu.dma_semaphore, #tpu.memory_space<semaphore_mem>>
    %139 = tpu.memref_squeeze %138 : memref<1x!tpu.dma_semaphore, #tpu.memory_space<semaphore_mem>> -> memref<!tpu.dma_semaphore, #tpu.memory_space<semaphore_mem>>
    tpu.wait_dma2 semaphore(%139 : memref<!tpu.dma_semaphore, #tpu.memory_space<semaphore_mem>>) src(%136 : memref<1x32xf32, #tpu.memory_space<any>>) dst(%137 : memref<1x32xf32, #tpu.memory_space<vmem>>)
    %c15_i32_108 = arith.constant 15 : i32
    %c0_i32_109 = arith.constant 0 : i32
    %140 = tpu.memref_slice %arg1[%75, %c0_i32_109] : memref<64x32xf32, #tpu.memory_space<any>> -> memref<1x32xf32, #tpu.memory_space<any>>
    %c15_i32_110 = arith.constant 15 : i32
    %c0_i32_111 = arith.constant 0 : i32
    %141 = tpu.memref_slice %arg3[%c15_i32_110, %c0_i32_111] : memref<16x32xf32, #tpu.memory_space<vmem>> -> memref<1x32xf32, #tpu.memory_space<vmem>>
    %142 = tpu.memref_slice %arg4[%c15_i32_108] : memref<16x!tpu.dma_semaphore, #tpu.memory_space<semaphore_mem>> -> memref<1x!tpu.dma_semaphore, #tpu.memory_space<semaphore_mem>>
    %143 = tpu.memref_squeeze %142 : memref<1x!tpu.dma_semaphore, #tpu.memory_space<semaphore_mem>> -> memref<!tpu.dma_semaphore, #tpu.memory_space<semaphore_mem>>
    tpu.wait_dma2 semaphore(%143 : memref<!tpu.dma_semaphore, #tpu.memory_space<semaphore_mem>>) src(%140 : memref<1x32xf32, #tpu.memory_space<any>>) dst(%141 : memref<1x32xf32, #tpu.memory_space<vmem>>)
    %c0_112 = arith.constant 0 : index
    %c0_113 = arith.constant 0 : index
    %144 = vector.load %arg3[%c0_112, %c0_113] : memref<16x32xf32, #tpu.memory_space<vmem>>, vector<16x32xf32>
    %145 = arith.mulf %144, %144 : vector<16x32xf32>
    %cst = arith.constant dense<0.000000e+00> : vector<16xf32>
    %146 = vector.multi_reduction <add>, %145, %cst [1] : vector<16x32xf32> to vector<16xf32>
    %147 = vector.shape_cast %146 : vector<16xf32> to vector<16x1xf32>
    %cst_114 = arith.constant 1.000000e-24 : f32
    %148 = vector.broadcast %cst_114 : f32 to vector<16x1xf32>
    %149 = arith.maximumf %147, %148 : vector<16x1xf32>
    %150 = math.rsqrt %149 : vector<16x1xf32>
    %151 = vector.broadcast %150 : vector<16x1xf32> to vector<16x32xf32>
    %152 = arith.mulf %144, %151 : vector<16x32xf32>
    %c0_115 = arith.constant 0 : index
    %c0_116 = arith.constant 0 : index
    %153 = vector.load %arg2[%c0_115, %c0_116] : memref<16x32xf32, #tpu.memory_space<vmem>>, vector<16x32xf32>
    tpu.vector_store %arg2[%c0_115, %c0_116], %152 {strides = array<i32>} : memref<16x32xf32, #tpu.memory_space<vmem>>, vector<16x32xf32>,
    return
  }
}

</mosaic_0001>

<llo_original>
// kernel: tpu_custom_call.1
$region0: #{tpu_custom_call.1}
  #allocation0 [shape = 'u32[]', space=smem, size = 0x4, offset = 0x4, fixed_abs, tag = 'smem constant byte address 0x4 - core index']
  #allocation1 [shape = 'u32[144,128]{1,0:T(1,128)}', space=vmem, size = 0x12000, scoped, tag = 'internal scratch']
  #allocation2 [shape = 'f32[16,32]{1,0:T(8,128)}', space=vmem, size = 0x2000, scoped, tag = 'scratch operand']
  #allocation3 [shape = 's32[16]{0}', space=sflag, size = 0x40, scoped, tag = 'scratch operand']
  #allocation8 [shape = 's32[]', space=sflag, size = 0x4, offset = 0, fixed_abs, tag = 'sflag constant byte address 0x0 - dummy sync flag']
  #allocation9 [shape = 's32[]', space=sflag, size = 0x4, offset = 0, fixed_abs, tag = 'sflag constant byte address 0x0 - dummy sync flag']
  #allocation10 [shape = 's32[]', space=sflag, size = 0x4, offset = 0, fixed_abs, tag = 'sflag constant byte address 0x0 - dummy sync flag']
  #allocation11 [shape = 's32[]', space=sflag, size = 0x4, offset = 0, fixed_abs, tag = 'sflag constant byte address 0x0 - dummy sync flag']
  #allocation12 [shape = 's32[]', space=sflag, size = 0x4, offset = 0, fixed_abs, tag = 'sflag constant byte address 0x0 - dummy sync flag']
  #allocation13 [shape = 's32[]', space=sflag, size = 0x4, offset = 0, fixed_abs, tag = 'sflag constant byte address 0x0 - dummy sync flag']
  #allocation14 [shape = 's32[]', space=sflag, size = 0x4, offset = 0, fixed_abs, tag = 'sflag constant byte address 0x0 - dummy sync flag']
  #allocation15 [shape = 's32[]', space=sflag, size = 0x4, offset = 0, fixed_abs, tag = 'sflag constant byte address 0x0 - dummy sync flag']
  #allocation16 [shape = 's32[]', space=sflag, size = 0x4, offset = 0, fixed_abs, tag = 'sflag constant byte address 0x0 - dummy sync flag']
  #allocation17 [shape = 's32[]', space=sflag, size = 0x4, offset = 0, fixed_abs, tag = 'sflag constant byte address 0x0 - dummy sync flag']
  #allocation18 [shape = 's32[]', space=sflag, size = 0x4, offset = 0, fixed_abs, tag = 'sflag constant byte address 0x0 - dummy sync flag']
  #allocation19 [shape = 's32[]', space=sflag, size = 0x4, offset = 0, fixed_abs, tag = 'sflag constant byte address 0x0 - dummy sync flag']
  #allocation20 [shape = 's32[]', space=sflag, size = 0x4, offset = 0, fixed_abs, tag = 'sflag constant byte address 0x0 - dummy sync flag']
  #allocation21 [shape = 's32[]', space=sflag, size = 0x4, offset = 0, fixed_abs, tag = 'sflag constant byte address 0x0 - dummy sync flag']
  #allocation22 [shape = 's32[]', space=sflag, size = 0x4, offset = 0, fixed_abs, tag = 'sflag constant byte address 0x0 - dummy sync flag']
  #allocation23 [shape = 's32[]', space=sflag, size = 0x4, offset = 0, fixed_abs, tag = 'sflag constant byte address 0x0 - dummy sync flag']
  %s0 = inlined_call_operand.vmem [shape: s32[16], index: 0, kind: input, shape index: {}]
  %s1 = inlined_call_operand.vmem [shape: f32[64,32], index: 1, kind: input, shape index: {}]
  %s2 = inlined_call_operand.hbm [shape: f32[16,32], index: 2, kind: output, shape index: {}]
  %s3 = sld [smem:[#allocation0]]
  $region498: #{tpu_custom_call.1} parent=0
    _
  %s5 = ssub.s32 1, %s3
  %s6 = scalar_select 0, %s5, %s3
  $region1: #{tpu_custom_call.1} parent=0
    #allocation4 [shape = 'u8[512]{0}', space=smem, size = 0x200, scoped, tag = 'input window, operand 0, single buffered']
    #allocation5 [shape = 's32[1]{0}', space=sflag, size = 0x4, scoped, tag = 'scoped memory for tpu_custom_call.1']
    #allocation6 [shape = 's32[1]{0}', space=sflag, size = 0x4, scoped, tag = 'scoped memory for tpu_custom_call.1']
    #allocation7 [shape = 'u8[8192]{0}', space=vmem, size = 0x2000, scoped, tag = 'output window, operand 0, single buffered']
    %7 = vsyncpa [#allocation6], 0
    %8 = vsyncpa [#allocation5], 0
    // Predicated region
    $region2: #{tpu_custom_call.1} parent=1 // pred_check
      _
    $region3: #{tpu_custom_call.1} parent=1 // pred_check_branch
      %10 = sbr.rel (0) target = $region5
    $region4: #{tpu_custom_call.1} parent=1 // pred_region
      %s12 = ssub.s32 16, 16
      %13 = vsyncadd [#allocation6], %s12
      %s15 = sshll.u32 %s0, 4
      %s16 = int_to_ptr.vmem [resolvable:$true] %s15
      %18 = dma.vmem_to_smem %s16, 16, [#allocation4], [#allocation6]
    $region5: #{tpu_custom_call.1} parent=1 // pred_fallthru
      _
    // Predicated region
    $region6: #{tpu_custom_call.1} parent=1 // pred_check
      _
    $region7: #{tpu_custom_call.1} parent=1 // pred_check_branch
      %20 = sbr.rel (0) target = $region9
    $region8: #{tpu_custom_call.1} parent=1 // pred_region
      %21 = dma.done [#allocation6], 16
    $region9: #{tpu_custom_call.1} parent=1 // pred_fallthru
      _
    %22 = sfence
    %s23 = sld [smem:[#allocation4]]
    %s24 = scalar_lea.vmem %s1, %s23
    %p26 = scmp.lt.u32.totalorder 1, 8
    %p27 = pneg %p26
    // Predicated region
    $region10: #{tpu_custom_call.1} parent=1 // pred_check
      _
    $region11: #{tpu_custom_call.1} parent=1 // pred_check_branch
      %29 = sbr.rel (%p26) target = $region13
    $region12: #{tpu_custom_call.1} parent=1 // pred_region
      %s45 = sand.u32 1, 7
      %p46 = scmp.eq.s32.totalorder %s45, 0
      %p47 = pneg %p46
      // Predicated region
      $region25: #{tpu_custom_call.1} parent=12 // pred_check
        _
      $region26: #{tpu_custom_call.1} parent=12 // pred_check_branch
        %49 = sbr.rel (%p46) target = $region28
      $region27: #{tpu_custom_call.1} parent=12 // pred_region
        %s50 = sand.u32 1, 7
        %s51 = ssub.s32 1, %s50
        %s52 = scalar_lea.vmem %s24, %s51
        %s53 = ssub.s32 1, %s50
        %s54 = scalar_lea.vmem [#allocation2], %s53
        %s55 = sshll.u32 1, %s50
        %s56 = ssub.s32 %s55, 1
        loop: start=0, step=1, limit=1
        $region29: #{tpu_custom_call.1} parent=27 // loop_pre_header
          _
        $region30: #{tpu_custom_call.1} parent=27 // loop_header
          %s58 = sphi 0, %s62
          %p59 = scmp.ge.s32.totalorder %s58, 1
          %s63 = sphi %s52, %s52
          %s64 = sphi %s54, %s54
        $region31: #{tpu_custom_call.1} parent=27 // loop_header_branch
          %61 = sbr.rel (%p59) target = $region35
        $region32: #{tpu_custom_call.1} parent=27 // loop_body
          %v65 = vld [vmem:[%s63] sm:%s56]
          %66 = vst [vmem:[%s64] sm:%s56] %v65
        $region33: #{tpu_custom_call.1} parent=27 // loop_footer
          %s62 = sadd.s32 1, %s58
        $region34: #{tpu_custom_call.1} parent=27 // loop_footer_branch
          %57 = sbr.rel target = $region30
        $region35: #{tpu_custom_call.1} parent=27 // loop_exit
          _
      $region28: #{tpu_custom_call.1} parent=12 // pred_fallthru
        _
    $region13: #{tpu_custom_call.1} parent=1 // pred_fallthru
      _
    // Predicated region
    $region14: #{tpu_custom_call.1} parent=1 // pred_check
      %p30 = pneg %p26
    $region15: #{tpu_custom_call.1} parent=1 // pred_check_branch
      %32 = sbr.rel (%p30) target = $region17
    $region16: #{tpu_custom_call.1} parent=1 // pred_region
      %s33 = sshll.u32 1, 1
      %s34 = ssub.s32 %s33, 1
      loop: start=0, step=1, limit=1
      $region18: #{tpu_custom_call.1} parent=16 // loop_pre_header
        _
      $region19: #{tpu_custom_call.1} parent=16 // loop_header
        %s36 = sphi 0, %s40
        %p37 = scmp.ge.s32.totalorder %s36, 1
        %s41 = sphi %s24, %s24
        %s42 = sphi [#allocation2], [#allocation2]
      $region20: #{tpu_custom_call.1} parent=16 // loop_header_branch
        %39 = sbr.rel (%p37) target = $region24
      $region21: #{tpu_custom_call.1} parent=16 // loop_body
        %v43 = vld [vmem:[%s41] sm:%s34]
        %44 = vst [vmem:[%s42] sm:%s34] %v43
      $region22: #{tpu_custom_call.1} parent=16 // loop_footer
        %s40 = sadd.s32 1, %s36
      $region23: #{tpu_custom_call.1} parent=16 // loop_footer_branch
        %35 = sbr.rel target = $region19
      $region24: #{tpu_custom_call.1} parent=16 // loop_exit
        _
    $region17: #{tpu_custom_call.1} parent=1 // pred_fallthru
      _
    // Predicated region
    $region36: #{tpu_custom_call.1} parent=1 // pred_check
      _
    $region37: #{tpu_custom_call.1} parent=1 // pred_check_branch
      %69 = sbr.rel (0) target = $region39
    $region38: #{tpu_custom_call.1} parent=1 // pred_region
      %70 = vsyncadd [#allocation3], 16
    $region39: #{tpu_custom_call.1} parent=1 // pred_fallthru
      _
    %s71 = sld [smem:[#allocation4 + $0x1]]
    %s72 = scalar_lea.vmem %s1, %s71
    %s73 = scalar_lea.vmem [#allocation2], 1
    %s74 = scalar_lea.sflag [#allocation3], 1
    %p76 = scmp.lt.u32.totalorder 1, 8
    %p77 = pneg %p76
    // Predicated region
    $region40: #{tpu_custom_call.1} parent=1 // pred_check
      _
    $region41: #{tpu_custom_call.1} parent=1 // pred_check_branch
      %79 = sbr.rel (%p76) target = $region43
    $region42: #{tpu_custom_call.1} parent=1 // pred_region
      %s95 = sand.u32 1, 7
      %p96 = scmp.eq.s32.totalorder %s95, 0
      %p97 = pneg %p96
      // Predicated region
      $region55: #{tpu_custom_call.1} parent=42 // pred_check
        _
      $region56: #{tpu_custom_call.1} parent=42 // pred_check_branch
        %99 = sbr.rel (%p96) target = $region58
      $region57: #{tpu_custom_call.1} parent=42 // pred_region
        %s100 = sand.u32 1, 7
        %s101 = ssub.s32 1, %s100
        %s102 = scalar_lea.vmem %s72, %s101
        %s103 = ssub.s32 1, %s100
        %s104 = scalar_lea.vmem %s73, %s103 [#allocation2]
        %s105 = sshll.u32 1, %s100
        %s106 = ssub.s32 %s105, 1
        loop: start=0, step=1, limit=1
        $region59: #{tpu_custom_call.1} parent=57 // loop_pre_header
          _
        $region60: #{tpu_custom_call.1} parent=57 // loop_header
          %s108 = sphi 0, %s112
          %p109 = scmp.ge.s32.totalorder %s108, 1
          %s113 = sphi %s102, %s102
          %s114 = sphi %s104, %s104
        $region61: #{tpu_custom_call.1} parent=57 // loop_header_branch
          %111 = sbr.rel (%p109) target = $region65
        $region62: #{tpu_custom_call.1} parent=57 // loop_body
          %v115 = vld [vmem:[%s113] sm:%s106]
          %116 = vst [vmem:[%s114] sm:%s106] %v115
        $region63: #{tpu_custom_call.1} parent=57 // loop_footer
          %s112 = sadd.s32 1, %s108
        $region64: #{tpu_custom_call.1} parent=57 // loop_footer_branch
          %107 = sbr.rel target = $region60
        $region65: #{tpu_custom_call.1} parent=57 // loop_exit
          _
      $region58: #{tpu_custom_call.1} parent=42 // pred_fallthru
        _
    $region43: #{tpu_custom_call.1} parent=1 // pred_fallthru
      _
    // Predicated region
    $region44: #{tpu_custom_call.1} parent=1 // pred_check
      %p80 = pneg %p76
    $region45: #{tpu_custom_call.1} parent=1 // pred_check_branch
      %82 = sbr.rel (%p80) target = $region47
    $region46: #{tpu_custom_call.1} parent=1 // pred_region
      %s83 = sshll.u32 1, 1
      %s84 = ssub.s32 %s83, 1
      loop: start=0, step=1, limit=1
      $region48: #{tpu_custom_call.1} parent=46 // loop_pre_header
        _
      $region49: #{tpu_custom_call.1} parent=46 // loop_header
        %s86 = sphi 0, %s90
        %p87 = scmp.ge.s32.totalorder %s86, 1
        %s91 = sphi %s72, %s72
        %s92 = sphi %s73, %s73
      $region50: #{tpu_custom_call.1} parent=46 // loop_header_branch
        %89 = sbr.rel (%p87) target = $region54
      $region51: #{tpu_custom_call.1} parent=46 // loop_body
        %v93 = vld [vmem:[%s91] sm:%s84]
        %94 = vst [vmem:[%s92] sm:%s84] %v93
      $region52: #{tpu_custom_call.1} parent=46 // loop_footer
        %s90 = sadd.s32 1, %s86
      $region53: #{tpu_custom_call.1} parent=46 // loop_footer_branch
        %85 = sbr.rel target = $region49
      $region54: #{tpu_custom_call.1} parent=46 // loop_exit
        _
    $region47: #{tpu_custom_call.1} parent=1 // pred_fallthru
      _
    // Predicated region
    $region66: #{tpu_custom_call.1} parent=1 // pred_check
      _
    $region67: #{tpu_custom_call.1} parent=1 // pred_check_branch
      %119 = sbr.rel (0) target = $region69
    $region68: #{tpu_custom_call.1} parent=1 // pred_region
      %120 = vsyncadd %s74, 16
    $region69: #{tpu_custom_call.1} parent=1 // pred_fallthru
      _
    %s121 = sld [smem:[#allocation4 + $0x2]]
    %s122 = scalar_lea.vmem %s1, %s121
    %s123 = scalar_lea.vmem [#allocation2], 2
    %s124 = scalar_lea.sflag [#allocation3], 2
    %p126 = scmp.lt.u32.totalorder 1, 8
    %p127 = pneg %p126
    // Predicated region
    $region70: #{tpu_custom_call.1} parent=1 // pred_check
      _
    $region71: #{tpu_custom_call.1} parent=1 // pred_check_branch
      %129 = sbr.rel (%p126) target = $region73
    $region72: #{tpu_custom_call.1} parent=1 // pred_region
      %s145 = sand.u32 1, 7
      %p146 = scmp.eq.s32.totalorder %s145, 0
      %p147 = pneg %p146
      // Predicated region
      $region85: #{tpu_custom_call.1} parent=72 // pred_check
        _
      $region86: #{tpu_custom_call.1} parent=72 // pred_check_branch
        %149 = sbr.rel (%p146) target = $region88
      $region87: #{tpu_custom_call.1} parent=72 // pred_region
        %s150 = sand.u32 1, 7
        %s151 = ssub.s32 1, %s150
        %s152 = scalar_lea.vmem %s122, %s151
        %s153 = ssub.s32 1, %s150
        %s154 = scalar_lea.vmem %s123, %s153 [#allocation2]
        %s155 = sshll.u32 1, %s150
        %s156 = ssub.s32 %s155, 1
        loop: start=0, step=1, limit=1
        $region89: #{tpu_custom_call.1} parent=87 // loop_pre_header
          _
        $region90: #{tpu_custom_call.1} parent=87 // loop_header
          %s158 = sphi 0, %s162
          %p159 = scmp.ge.s32.totalorder %s158, 1
          %s163 = sphi %s152, %s152
          %s164 = sphi %s154, %s154
        $region91: #{tpu_custom_call.1} parent=87 // loop_header_branch
          %161 = sbr.rel (%p159) target = $region95
        $region92: #{tpu_custom_call.1} parent=87 // loop_body
          %v165 = vld [vmem:[%s163] sm:%s156]
          %166 = vst [vmem:[%s164] sm:%s156] %v165
        $region93: #{tpu_custom_call.1} parent=87 // loop_footer
          %s162 = sadd.s32 1, %s158
        $region94: #{tpu_custom_call.1} parent=87 // loop_footer_branch
          %157 = sbr.rel target = $region90
        $region95: #{tpu_custom_call.1} parent=87 // loop_exit
          _
      $region88: #{tpu_custom_call.1} parent=72 // pred_fallthru
        _
    $region73: #{tpu_custom_call.1} parent=1 // pred_fallthru
      _
    // Predicated region
    $region74: #{tpu_custom_call.1} parent=1 // pred_check
      %p130 = pneg %p126
    $region75: #{tpu_custom_call.1} parent=1 // pred_check_branch
      %132 = sbr.rel (%p130) target = $region77
    $region76: #{tpu_custom_call.1} parent=1 // pred_region
      %s133 = sshll.u32 1, 1
      %s134 = ssub.s32 %s133, 1
      loop: start=0, step=1, limit=1
      $region78: #{tpu_custom_call.1} parent=76 // loop_pre_header
        _
      $region79: #{tpu_custom_call.1} parent=76 // loop_header
        %s136 = sphi 0, %s140
        %p137 = scmp.ge.s32.totalorder %s136, 1
        %s141 = sphi %s122, %s122
        %s142 = sphi %s123, %s123
      $region80: #{tpu_custom_call.1} parent=76 // loop_header_branch
        %139 = sbr.rel (%p137) target = $region84
      $region81: #{tpu_custom_call.1} parent=76 // loop_body
        %v143 = vld [vmem:[%s141] sm:%s134]
        %144 = vst [vmem:[%s142] sm:%s134] %v143
      $region82: #{tpu_custom_call.1} parent=76 // loop_footer
        %s140 = sadd.s32 1, %s136
      $region83: #{tpu_custom_call.1} parent=76 // loop_footer_branch
        %135 = sbr.rel target = $region79
      $region84: #{tpu_custom_call.1} parent=76 // loop_exit
        _
    $region77: #{tpu_custom_call.1} parent=1 // pred_fallthru
      _
    // Predicated region
    $region96: #{tpu_custom_call.1} parent=1 // pred_check
      _
    $region97: #{tpu_custom_call.1} parent=1 // pred_check_branch
      %169 = sbr.rel (0) target = $region99
    $region98: #{tpu_custom_call.1} parent=1 // pred_region
      %170 = vsyncadd %s124, 16
    $region99: #{tpu_custom_call.1} parent=1 // pred_fallthru
      _
    %s171 = sld [smem:[#allocation4 + $0x3]]
    %s172 = scalar_lea.vmem %s1, %s171
    %s173 = scalar_lea.vmem [#allocation2], 3
    %s174 = scalar_lea.sflag [#allocation3], 3
    %p176 = scmp.lt.u32.totalorder 1, 8
    %p177 = pneg %p176
    // Predicated region
    $region100: #{tpu_custom_call.1} parent=1 // pred_check
      _
    $region101: #{tpu_custom_call.1} parent=1 // pred_check_branch
      %179 = sbr.rel (%p176) target = $region103
    $region102: #{tpu_custom_call.1} parent=1 // pred_region
      %s195 = sand.u32 1, 7
      %p196 = scmp.eq.s32.totalorder %s195, 0
      %p197 = pneg %p196
      // Predicated region
      $region115: #{tpu_custom_call.1} parent=102 // pred_check
        _
      $region116: #{tpu_custom_call.1} parent=102 // pred_check_branch
        %199 = sbr.rel (%p196) target = $region118
      $region117: #{tpu_custom_call.1} parent=102 // pred_region
        %s200 = sand.u32 1, 7
        %s201 = ssub.s32 1, %s200
        %s202 = scalar_lea.vmem %s172, %s201
        %s203 = ssub.s32 1, %s200
        %s204 = scalar_lea.vmem %s173, %s203 [#allocation2]
        %s205 = sshll.u32 1, %s200
        %s206 = ssub.s32 %s205, 1
        loop: start=0, step=1, limit=1
        $region119: #{tpu_custom_call.1} parent=117 // loop_pre_header
          _
        $region120: #{tpu_custom_call.1} parent=117 // loop_header
          %s208 = sphi 0, %s212
          %p209 = scmp.ge.s32.totalorder %s208, 1
          %s213 = sphi %s202, %s202
          %s214 = sphi %s204, %s204
        $region121: #{tpu_custom_call.1} parent=117 // loop_header_branch
          %211 = sbr.rel (%p209) target = $region125
        $region122: #{tpu_custom_call.1} parent=117 // loop_body
          %v215 = vld [vmem:[%s213] sm:%s206]
          %216 = vst [vmem:[%s214] sm:%s206] %v215
        $region123: #{tpu_custom_call.1} parent=117 // loop_footer
          %s212 = sadd.s32 1, %s208
        $region124: #{tpu_custom_call.1} parent=117 // loop_footer_branch
          %207 = sbr.rel target = $region120
        $region125: #{tpu_custom_call.1} parent=117 // loop_exit
          _
      $region118: #{tpu_custom_call.1} parent=102 // pred_fallthru
        _
    $region103: #{tpu_custom_call.1} parent=1 // pred_fallthru
      _
    // Predicated region
    $region104: #{tpu_custom_call.1} parent=1 // pred_check
      %p180 = pneg %p176
    $region105: #{tpu_custom_call.1} parent=1 // pred_check_branch
      %182 = sbr.rel (%p180) target = $region107
    $region106: #{tpu_custom_call.1} parent=1 // pred_region
      %s183 = sshll.u32 1, 1
      %s184 = ssub.s32 %s183, 1
      loop: start=0, step=1, limit=1
      $region108: #{tpu_custom_call.1} parent=106 // loop_pre_header
        _
      $region109: #{tpu_custom_call.1} parent=106 // loop_header
        %s186 = sphi 0, %s190
        %p187 = scmp.ge.s32.totalorder %s186, 1
        %s191 = sphi %s172, %s172
        %s192 = sphi %s173, %s173
      $region110: #{tpu_custom_call.1} parent=106 // loop_header_branch
        %189 = sbr.rel (%p187) target = $region114
      $region111: #{tpu_custom_call.1} parent=106 // loop_body
        %v193 = vld [vmem:[%s191] sm:%s184]
        %194 = vst [vmem:[%s192] sm:%s184] %v193
      $region112: #{tpu_custom_call.1} parent=106 // loop_footer
        %s190 = sadd.s32 1, %s186
      $region113: #{tpu_custom_call.1} parent=106 // loop_footer_branch
        %185 = sbr.rel target = $region109
      $region114: #{tpu_custom_call.1} parent=106 // loop_exit
        _
    $region107: #{tpu_custom_call.1} parent=1 // pred_fallthru
      _
    // Predicated region
    $region126: #{tpu_custom_call.1} parent=1 // pred_check
      _
    $region127: #{tpu_custom_call.1} parent=1 // pred_check_branch
      %219 = sbr.rel (0) target = $region129
    $region128: #{tpu_custom_call.1} parent=1 // pred_region
      %220 = vsyncadd %s174, 16
    $region129: #{tpu_custom_call.1} parent=1 // pred_fallthru
      _
    %s221 = sld [smem:[#allocation4 + $0x4]]
    %s222 = scalar_lea.vmem %s1, %s221
    %s223 = scalar_lea.vmem [#allocation2], 4
    %s224 = scalar_lea.sflag [#allocation3], 4
    %p226 = scmp.lt.u32.totalorder 1, 8
    %p227 = pneg %p226
    // Predicated region
    $region130: #{tpu_custom_call.1} parent=1 // pred_check
      _
    $region131: #{tpu_custom_call.1} parent=1 // pred_check_branch
      %229 = sbr.rel (%p226) target = $region133
    $region132: #{tpu_custom_call.1} parent=1 // pred_region
      %s245 = sand.u32 1, 7
      %p246 = scmp.eq.s32.totalorder %s245, 0
      %p247 = pneg %p246
      // Predicated region
      $region145: #{tpu_custom_call.1} parent=132 // pred_check
        _
      $region146: #{tpu_custom_call.1} parent=132 // pred_check_branch
        %249 = sbr.rel (%p246) target = $region148
      $region147: #{tpu_custom_call.1} parent=132 // pred_region
        %s250 = sand.u32 1, 7
        %s251 = ssub.s32 1, %s250
        %s252 = scalar_lea.vmem %s222, %s251
        %s253 = ssub.s32 1, %s250
        %s254 = scalar_lea.vmem %s223, %s253 [#allocation2]
        %s255 = sshll.u32 1, %s250
        %s256 = ssub.s32 %s255, 1
        loop: start=0, step=1, limit=1
        $region149: #{tpu_custom_call.1} parent=147 // loop_pre_header
          _
        $region150: #{tpu_custom_call.1} parent=147 // loop_header
          %s258 = sphi 0, %s262
          %p259 = scmp.ge.s32.totalorder %s258, 1
          %s263 = sphi %s252, %s252
          %s264 = sphi %s254, %s254
        $region151: #{tpu_custom_call.1} parent=147 // loop_header_branch
          %261 = sbr.rel (%p259) target = $region155
        $region152: #{tpu_custom_call.1} parent=147 // loop_body
          %v265 = vld [vmem:[%s263] sm:%s256]
          %266 = vst [vmem:[%s264] sm:%s256] %v265
        $region153: #{tpu_custom_call.1} parent=147 // loop_footer
          %s262 = sadd.s32 1, %s258
        $region154: #{tpu_custom_call.1} parent=147 // loop_footer_branch
          %257 = sbr.rel target = $region150
        $region155: #{tpu_custom_call.1} parent=147 // loop_exit
          _
      $region148: #{tpu_custom_call.1} parent=132 // pred_fallthru
        _
    $region133: #{tpu_custom_call.1} parent=1 // pred_fallthru
      _
    // Predicated region
    $region134: #{tpu_custom_call.1} parent=1 // pred_check
      %p230 = pneg %p226
    $region135: #{tpu_custom_call.1} parent=1 // pred_check_branch
      %232 = sbr.rel (%p230) target = $region137
    $region136: #{tpu_custom_call.1} parent=1 // pred_region
      %s233 = sshll.u32 1, 1
      %s234 = ssub.s32 %s233, 1
      loop: start=0, step=1, limit=1
      $region138: #{tpu_custom_call.1} parent=136 // loop_pre_header
        _
      $region139: #{tpu_custom_call.1} parent=136 // loop_header
        %s236 = sphi 0, %s240
        %p237 = scmp.ge.s32.totalorder %s236, 1
        %s241 = sphi %s222, %s222
        %s242 = sphi %s223, %s223
      $region140: #{tpu_custom_call.1} parent=136 // loop_header_branch
        %239 = sbr.rel (%p237) target = $region144
      $region141: #{tpu_custom_call.1} parent=136 // loop_body
        %v243 = vld [vmem:[%s241] sm:%s234]
        %244 = vst [vmem:[%s242] sm:%s234] %v243
      $region142: #{tpu_custom_call.1} parent=136 // loop_footer
        %s240 = sadd.s32 1, %s236
      $region143: #{tpu_custom_call.1} parent=136 // loop_footer_branch
        %235 = sbr.rel target = $region139
      $region144: #{tpu_custom_call.1} parent=136 // loop_exit
        _
    $region137: #{tpu_custom_call.1} parent=1 // pred_fallthru
      _
    // Predicated region
    $region156: #{tpu_custom_call.1} parent=1 // pred_check
      _
    $region157: #{tpu_custom_call.1} parent=1 // pred_check_branch
      %269 = sbr.rel (0) target = $region159
    $region158: #{tpu_custom_call.1} parent=1 // pred_region
      %270 = vsyncadd %s224, 16
    $region159: #{tpu_custom_call.1} parent=1 // pred_fallthru
      _
    %s271 = sld [smem:[#allocation4 + $0x5]]
    %s272 = scalar_lea.vmem %s1, %s271
    %s273 = scalar_lea.vmem [#allocation2], 5
    %s274 = scalar_lea.sflag [#allocation3], 5
    %p276 = scmp.lt.u32.totalorder 1, 8
    %p277 = pneg %p276
    // Predicated region
    $region160: #{tpu_custom_call.1} parent=1 // pred_check
      _
    $region161: #{tpu_custom_call.1} parent=1 // pred_check_branch
      %279 = sbr.rel (%p276) target = $region163
    $region162: #{tpu_custom_call.1} parent=1 // pred_region
      %s295 = sand.u32 1, 7
      %p296 = scmp.eq.s32.totalorder %s295, 0
      %p297 = pneg %p296
      // Predicated region
      $region175: #{tpu_custom_call.1} parent=162 // pred_check
        _
      $region176: #{tpu_custom_call.1} parent=162 // pred_check_branch
        %299 = sbr.rel (%p296) target = $region178
      $region177: #{tpu_custom_call.1} parent=162 // pred_region
        %s300 = sand.u32 1, 7
        %s301 = ssub.s32 1, %s300
        %s302 = scalar_lea.vmem %s272, %s301
        %s303 = ssub.s32 1, %s300
        %s304 = scalar_lea.vmem %s273, %s303 [#allocation2]
        %s305 = sshll.u32 1, %s300
        %s306 = ssub.s32 %s305, 1
        loop: start=0, step=1, limit=1
        $region179: #{tpu_custom_call.1} parent=177 // loop_pre_header
          _
        $region180: #{tpu_custom_call.1} parent=177 // loop_header
          %s308 = sphi 0, %s312
          %p309 = scmp.ge.s32.totalorder %s308, 1
          %s313 = sphi %s302, %s302
          %s314 = sphi %s304, %s304
        $region181: #{tpu_custom_call.1} parent=177 // loop_header_branch
          %311 = sbr.rel (%p309) target = $region185
        $region182: #{tpu_custom_call.1} parent=177 // loop_body
          %v315 = vld [vmem:[%s313] sm:%s306]
          %316 = vst [vmem:[%s314] sm:%s306] %v315
        $region183: #{tpu_custom_call.1} parent=177 // loop_footer
          %s312 = sadd.s32 1, %s308
        $region184: #{tpu_custom_call.1} parent=177 // loop_footer_branch
          %307 = sbr.rel target = $region180
        $region185: #{tpu_custom_call.1} parent=177 // loop_exit
          _
      $region178: #{tpu_custom_call.1} parent=162 // pred_fallthru
        _
    $region163: #{tpu_custom_call.1} parent=1 // pred_fallthru
      _
    // Predicated region
    $region164: #{tpu_custom_call.1} parent=1 // pred_check
      %p280 = pneg %p276
    $region165: #{tpu_custom_call.1} parent=1 // pred_check_branch
      %282 = sbr.rel (%p280) target = $region167
    $region166: #{tpu_custom_call.1} parent=1 // pred_region
      %s283 = sshll.u32 1, 1
      %s284 = ssub.s32 %s283, 1
      loop: start=0, step=1, limit=1
      $region168: #{tpu_custom_call.1} parent=166 // loop_pre_header
        _
      $region169: #{tpu_custom_call.1} parent=166 // loop_header
        %s286 = sphi 0, %s290
        %p287 = scmp.ge.s32.totalorder %s286, 1
        %s291 = sphi %s272, %s272
        %s292 = sphi %s273, %s273
      $region170: #{tpu_custom_call.1} parent=166 // loop_header_branch
        %289 = sbr.rel (%p287) target = $region174
      $region171: #{tpu_custom_call.1} parent=166 // loop_body
        %v293 = vld [vmem:[%s291] sm:%s284]
        %294 = vst [vmem:[%s292] sm:%s284] %v293
      $region172: #{tpu_custom_call.1} parent=166 // loop_footer
        %s290 = sadd.s32 1, %s286
      $region173: #{tpu_custom_call.1} parent=166 // loop_footer_branch
        %285 = sbr.rel target = $region169
      $region174: #{tpu_custom_call.1} parent=166 // loop_exit
        _
    $region167: #{tpu_custom_call.1} parent=1 // pred_fallthru
      _
    // Predicated region
    $region186: #{tpu_custom_call.1} parent=1 // pred_check
      _
    $region187: #{tpu_custom_call.1} parent=1 // pred_check_branch
      %319 = sbr.rel (0) target = $region189
    $region188: #{tpu_custom_call.1} parent=1 // pred_region
      %320 = vsyncadd %s274, 16
    $region189: #{tpu_custom_call.1} parent=1 // pred_fallthru
      _
    %s321 = sld [smem:[#allocation4 + $0x6]]
    %s322 = scalar_lea.vmem %s1, %s321
    %s323 = scalar_lea.vmem [#allocation2], 6
    %s324 = scalar_lea.sflag [#allocation3], 6
    %p326 = scmp.lt.u32.totalorder 1, 8
    %p327 = pneg %p326
    // Predicated region
    $region190: #{tpu_custom_call.1} parent=1 // pred_check
      _
    $region191: #{tpu_custom_call.1} parent=1 // pred_check_branch
      %329 = sbr.rel (%p326) target = $region193
    $region192: #{tpu_custom_call.1} parent=1 // pred_region
      %s345 = sand.u32 1, 7
      %p346 = scmp.eq.s32.totalorder %s345, 0
      %p347 = pneg %p346
      // Predicated region
      $region205: #{tpu_custom_call.1} parent=192 // pred_check
        _
      $region206: #{tpu_custom_call.1} parent=192 // pred_check_branch
        %349 = sbr.rel (%p346) target = $region208
      $region207: #{tpu_custom_call.1} parent=192 // pred_region
        %s350 = sand.u32 1, 7
        %s351 = ssub.s32 1, %s350
        %s352 = scalar_lea.vmem %s322, %s351
        %s353 = ssub.s32 1, %s350
        %s354 = scalar_lea.vmem %s323, %s353 [#allocation2]
        %s355 = sshll.u32 1, %s350
        %s356 = ssub.s32 %s355, 1
        loop: start=0, step=1, limit=1
        $region209: #{tpu_custom_call.1} parent=207 // loop_pre_header
          _
        $region210: #{tpu_custom_call.1} parent=207 // loop_header
          %s358 = sphi 0, %s362
          %p359 = scmp.ge.s32.totalorder %s358, 1
          %s363 = sphi %s352, %s352
          %s364 = sphi %s354, %s354
        $region211: #{tpu_custom_call.1} parent=207 // loop_header_branch
          %361 = sbr.rel (%p359) target = $region215
        $region212: #{tpu_custom_call.1} parent=207 // loop_body
          %v365 = vld [vmem:[%s363] sm:%s356]
          %366 = vst [vmem:[%s364] sm:%s356] %v365
        $region213: #{tpu_custom_call.1} parent=207 // loop_footer
          %s362 = sadd.s32 1, %s358
        $region214: #{tpu_custom_call.1} parent=207 // loop_footer_branch
          %357 = sbr.rel target = $region210
        $region215: #{tpu_custom_call.1} parent=207 // loop_exit
          _
      $region208: #{tpu_custom_call.1} parent=192 // pred_fallthru
        _
    $region193: #{tpu_custom_call.1} parent=1 // pred_fallthru
      _
    // Predicated region
    $region194: #{tpu_custom_call.1} parent=1 // pred_check
      %p330 = pneg %p326
    $region195: #{tpu_custom_call.1} parent=1 // pred_check_branch
      %332 = sbr.rel (%p330) target = $region197
    $region196: #{tpu_custom_call.1} parent=1 // pred_region
      %s333 = sshll.u32 1, 1
      %s334 = ssub.s32 %s333, 1
      loop: start=0, step=1, limit=1
      $region198: #{tpu_custom_call.1} parent=196 // loop_pre_header
        _
      $region199: #{tpu_custom_call.1} parent=196 // loop_header
        %s336 = sphi 0, %s340
        %p337 = scmp.ge.s32.totalorder %s336, 1
        %s341 = sphi %s322, %s322
        %s342 = sphi %s323, %s323
      $region200: #{tpu_custom_call.1} parent=196 // loop_header_branch
        %339 = sbr.rel (%p337) target = $region204
      $region201: #{tpu_custom_call.1} parent=196 // loop_body
        %v343 = vld [vmem:[%s341] sm:%s334]
        %344 = vst [vmem:[%s342] sm:%s334] %v343
      $region202: #{tpu_custom_call.1} parent=196 // loop_footer
        %s340 = sadd.s32 1, %s336
      $region203: #{tpu_custom_call.1} parent=196 // loop_footer_branch
        %335 = sbr.rel target = $region199
      $region204: #{tpu_custom_call.1} parent=196 // loop_exit
        _
    $region197: #{tpu_custom_call.1} parent=1 // pred_fallthru
      _
    // Predicated region
    $region216: #{tpu_custom_call.1} parent=1 // pred_check
      _
    $region217: #{tpu_custom_call.1} parent=1 // pred_check_branch
      %369 = sbr.rel (0) target = $region219
    $region218: #{tpu_custom_call.1} parent=1 // pred_region
      %370 = vsyncadd %s324, 16
    $region219: #{tpu_custom_call.1} parent=1 // pred_fallthru
      _
    %s371 = sld [smem:[#allocation4 + $0x7]]
    %s372 = scalar_lea.vmem %s1, %s371
    %s373 = scalar_lea.vmem [#allocation2], 7
    %s374 = scalar_lea.sflag [#allocation3], 7
    %p376 = scmp.lt.u32.totalorder 1, 8
    %p377 = pneg %p376
    // Predicated region
    $region220: #{tpu_custom_call.1} parent=1 // pred_check
      _
    $region221: #{tpu_custom_call.1} parent=1 // pred_check_branch
      %379 = sbr.rel (%p376) target = $region223
    $region222: #{tpu_custom_call.1} parent=1 // pred_region
      %s395 = sand.u32 1, 7
      %p396 = scmp.eq.s32.totalorder %s395, 0
      %p397 = pneg %p396
      // Predicated region
      $region235: #{tpu_custom_call.1} parent=222 // pred_check
        _
      $region236: #{tpu_custom_call.1} parent=222 // pred_check_branch
        %399 = sbr.rel (%p396) target = $region238
      $region237: #{tpu_custom_call.1} parent=222 // pred_region
        %s400 = sand.u32 1, 7
        %s401 = ssub.s32 1, %s400
        %s402 = scalar_lea.vmem %s372, %s401
        %s403 = ssub.s32 1, %s400
        %s404 = scalar_lea.vmem %s373, %s403 [#allocation2]
        %s405 = sshll.u32 1, %s400
        %s406 = ssub.s32 %s405, 1
        loop: start=0, step=1, limit=1
        $region239: #{tpu_custom_call.1} parent=237 // loop_pre_header
          _
        $region240: #{tpu_custom_call.1} parent=237 // loop_header
          %s408 = sphi 0, %s412
          %p409 = scmp.ge.s32.totalorder %s408, 1
          %s413 = sphi %s402, %s402
          %s414 = sphi %s404, %s404
        $region241: #{tpu_custom_call.1} parent=237 // loop_header_branch
          %411 = sbr.rel (%p409) target = $region245
        $region242: #{tpu_custom_call.1} parent=237 // loop_body
          %v415 = vld [vmem:[%s413] sm:%s406]
          %416 = vst [vmem:[%s414] sm:%s406] %v415
        $region243: #{tpu_custom_call.1} parent=237 // loop_footer
          %s412 = sadd.s32 1, %s408
        $region244: #{tpu_custom_call.1} parent=237 // loop_footer_branch
          %407 = sbr.rel target = $region240
        $region245: #{tpu_custom_call.1} parent=237 // loop_exit
          _
      $region238: #{tpu_custom_call.1} parent=222 // pred_fallthru
        _
    $region223: #{tpu_custom_call.1} parent=1 // pred_fallthru
      _
    // Predicated region
    $region224: #{tpu_custom_call.1} parent=1 // pred_check
      %p380 = pneg %p376
    $region225: #{tpu_custom_call.1} parent=1 // pred_check_branch
      %382 = sbr.rel (%p380) target = $region227
    $region226: #{tpu_custom_call.1} parent=1 // pred_region
      %s383 = sshll.u32 1, 1
      %s384 = ssub.s32 %s383, 1
      loop: start=0, step=1, limit=1
      $region228: #{tpu_custom_call.1} parent=226 // loop_pre_header
        _
      $region229: #{tpu_custom_call.1} parent=226 // loop_header
        %s386 = sphi 0, %s390
        %p387 = scmp.ge.s32.totalorder %s386, 1
        %s391 = sphi %s372, %s372
        %s392 = sphi %s373, %s373
      $region230: #{tpu_custom_call.1} parent=226 // loop_header_branch
        %389 = sbr.rel (%p387) target = $region234
      $region231: #{tpu_custom_call.1} parent=226 // loop_body
        %v393 = vld [vmem:[%s391] sm:%s384]
        %394 = vst [vmem:[%s392] sm:%s384] %v393
      $region232: #{tpu_custom_call.1} parent=226 // loop_footer
        %s390 = sadd.s32 1, %s386
      $region233: #{tpu_custom_call.1} parent=226 // loop_footer_branch
        %385 = sbr.rel target = $region229
      $region234: #{tpu_custom_call.1} parent=226 // loop_exit
        _
    $region227: #{tpu_custom_call.1} parent=1 // pred_fallthru
      _
    // Predicated region
    $region246: #{tpu_custom_call.1} parent=1 // pred_check
      _
    $region247: #{tpu_custom_call.1} parent=1 // pred_check_branch
      %419 = sbr.rel (0) target = $region249
    $region248: #{tpu_custom_call.1} parent=1 // pred_region
      %420 = vsyncadd %s374, 16
    $region249: #{tpu_custom_call.1} parent=1 // pred_fallthru
      _
    %s421 = sld [smem:[#allocation4 + $0x8]]
    %s422 = scalar_lea.vmem %s1, %s421
    %s423 = scalar_lea.vmem [#allocation2], 8
    %s424 = scalar_lea.sflag [#allocation3], 8
    %p426 = scmp.lt.u32.totalorder 1, 8
    %p427 = pneg %p426
    // Predicated region
    $region250: #{tpu_custom_call.1} parent=1 // pred_check
      _
    $region251: #{tpu_custom_call.1} parent=1 // pred_check_branch
      %429 = sbr.rel (%p426) target = $region253
    $region252: #{tpu_custom_call.1} parent=1 // pred_region
      %s445 = sand.u32 1, 7
      %p446 = scmp.eq.s32.totalorder %s445, 0
      %p447 = pneg %p446
      // Predicated region
      $region265: #{tpu_custom_call.1} parent=252 // pred_check
        _
      $region266: #{tpu_custom_call.1} parent=252 // pred_check_branch
        %449 = sbr.rel (%p446) target = $region268
      $region267: #{tpu_custom_call.1} parent=252 // pred_region
        %s450 = sand.u32 1, 7
        %s451 = ssub.s32 1, %s450
        %s452 = scalar_lea.vmem %s422, %s451
        %s453 = ssub.s32 1, %s450
        %s454 = scalar_lea.vmem %s423, %s453 [#allocation2]
        %s455 = sshll.u32 1, %s450
        %s456 = ssub.s32 %s455, 1
        loop: start=0, step=1, limit=1
        $region269: #{tpu_custom_call.1} parent=267 // loop_pre_header
          _
        $region270: #{tpu_custom_call.1} parent=267 // loop_header
          %s458 = sphi 0, %s462
          %p459 = scmp.ge.s32.totalorder %s458, 1
          %s463 = sphi %s452, %s452
          %s464 = sphi %s454, %s454
        $region271: #{tpu_custom_call.1} parent=267 // loop_header_branch
          %461 = sbr.rel (%p459) target = $region275
        $region272: #{tpu_custom_call.1} parent=267 // loop_body
          %v465 = vld [vmem:[%s463] sm:%s456]
          %466 = vst [vmem:[%s464] sm:%s456] %v465
        $region273: #{tpu_custom_call.1} parent=267 // loop_footer
          %s462 = sadd.s32 1, %s458
        $region274: #{tpu_custom_call.1} parent=267 // loop_footer_branch
          %457 = sbr.rel target = $region270
        $region275: #{tpu_custom_call.1} parent=267 // loop_exit
          _
      $region268: #{tpu_custom_call.1} parent=252 // pred_fallthru
        _
    $region253: #{tpu_custom_call.1} parent=1 // pred_fallthru
      _
    // Predicated region
    $region254: #{tpu_custom_call.1} parent=1 // pred_check
      %p430 = pneg %p426
    $region255: #{tpu_custom_call.1} parent=1 // pred_check_branch
      %432 = sbr.rel (%p430) target = $region257
    $region256: #{tpu_custom_call.1} parent=1 // pred_region
      %s433 = sshll.u32 1, 1
      %s434 = ssub.s32 %s433, 1
      loop: start=0, step=1, limit=1
      $region258: #{tpu_custom_call.1} parent=256 // loop_pre_header
        _
      $region259: #{tpu_custom_call.1} parent=256 // loop_header
        %s436 = sphi 0, %s440
        %p437 = scmp.ge.s32.totalorder %s436, 1
        %s441 = sphi %s422, %s422
        %s442 = sphi %s423, %s423
      $region260: #{tpu_custom_call.1} parent=256 // loop_header_branch
        %439 = sbr.rel (%p437) target = $region264
      $region261: #{tpu_custom_call.1} parent=256 // loop_body
        %v443 = vld [vmem:[%s441] sm:%s434]
        %444 = vst [vmem:[%s442] sm:%s434] %v443
      $region262: #{tpu_custom_call.1} parent=256 // loop_footer
        %s440 = sadd.s32 1, %s436
      $region263: #{tpu_custom_call.1} parent=256 // loop_footer_branch
        %435 = sbr.rel target = $region259
      $region264: #{tpu_custom_call.1} parent=256 // loop_exit
        _
    $region257: #{tpu_custom_call.1} parent=1 // pred_fallthru
      _
    // Predicated region
    $region276: #{tpu_custom_call.1} parent=1 // pred_check
      _
    $region277: #{tpu_custom_call.1} parent=1 // pred_check_branch
      %469 = sbr.rel (0) target = $region279
    $region278: #{tpu_custom_call.1} parent=1 // pred_region
      %470 = vsyncadd %s424, 16
    $region279: #{tpu_custom_call.1} parent=1 // pred_fallthru
      _
    %s471 = sld [smem:[#allocation4 + $0x9]]
    %s472 = scalar_lea.vmem %s1, %s471
    %s473 = scalar_lea.vmem [#allocation2], 9
    %s474 = scalar_lea.sflag [#allocation3], 9
    %p476 = scmp.lt.u32.totalorder 1, 8
    %p477 = pneg %p476
    // Predicated region
    $region280: #{tpu_custom_call.1} parent=1 // pred_check
      _
    $region281: #{tpu_custom_call.1} parent=1 // pred_check_branch
      %479 = sbr.rel (%p476) target = $region283
    $region282: #{tpu_custom_call.1} parent=1 // pred_region
      %s495 = sand.u32 1, 7
      %p496 = scmp.eq.s32.totalorder %s495, 0
      %p497 = pneg %p496
      // Predicated region
      $region295: #{tpu_custom_call.1} parent=282 // pred_check
        _
      $region296: #{tpu_custom_call.1} parent=282 // pred_check_branch
        %499 = sbr.rel (%p496) target = $region298
      $region297: #{tpu_custom_call.1} parent=282 // pred_region
        %s500 = sand.u32 1, 7
        %s501 = ssub.s32 1, %s500
        %s502 = scalar_lea.vmem %s472, %s501
        %s503 = ssub.s32 1, %s500
        %s504 = scalar_lea.vmem %s473, %s503 [#allocation2]
        %s505 = sshll.u32 1, %s500
        %s506 = ssub.s32 %s505, 1
        loop: start=0, step=1, limit=1
        $region299: #{tpu_custom_call.1} parent=297 // loop_pre_header
          _
        $region300: #{tpu_custom_call.1} parent=297 // loop_header
          %s508 = sphi 0, %s512
          %p509 = scmp.ge.s32.totalorder %s508, 1
          %s513 = sphi %s502, %s502
          %s514 = sphi %s504, %s504
        $region301: #{tpu_custom_call.1} parent=297 // loop_header_branch
          %511 = sbr.rel (%p509) target = $region305
        $region302: #{tpu_custom_call.1} parent=297 // loop_body
          %v515 = vld [vmem:[%s513] sm:%s506]
          %516 = vst [vmem:[%s514] sm:%s506] %v515
        $region303: #{tpu_custom_call.1} parent=297 // loop_footer
          %s512 = sadd.s32 1, %s508
        $region304: #{tpu_custom_call.1} parent=297 // loop_footer_branch
          %507 = sbr.rel target = $region300
        $region305: #{tpu_custom_call.1} parent=297 // loop_exit
          _
      $region298: #{tpu_custom_call.1} parent=282 // pred_fallthru
        _
    $region283: #{tpu_custom_call.1} parent=1 // pred_fallthru
      _
    // Predicated region
    $region284: #{tpu_custom_call.1} parent=1 // pred_check
      %p480 = pneg %p476
    $region285: #{tpu_custom_call.1} parent=1 // pred_check_branch
      %482 = sbr.rel (%p480) target = $region287
    $region286: #{tpu_custom_call.1} parent=1 // pred_region
      %s483 = sshll.u32 1, 1
      %s484 = ssub.s32 %s483, 1
      loop: start=0, step=1, limit=1
      $region288: #{tpu_custom_call.1} parent=286 // loop_pre_header
        _
      $region289: #{tpu_custom_call.1} parent=286 // loop_header
        %s486 = sphi 0, %s490
        %p487 = scmp.ge.s32.totalorder %s486, 1
        %s491 = sphi %s472, %s472
        %s492 = sphi %s473, %s473
      $region290: #{tpu_custom_call.1} parent=286 // loop_header_branch
        %489 = sbr.rel (%p487) target = $region294
      $region291: #{tpu_custom_call.1} parent=286 // loop_body
        %v493 = vld [vmem:[%s491] sm:%s484]
        %494 = vst [vmem:[%s492] sm:%s484] %v493
      $region292: #{tpu_custom_call.1} parent=286 // loop_footer
        %s490 = sadd.s32 1, %s486
      $region293: #{tpu_custom_call.1} parent=286 // loop_footer_branch
        %485 = sbr.rel target = $region289
      $region294: #{tpu_custom_call.1} parent=286 // loop_exit
        _
    $region287: #{tpu_custom_call.1} parent=1 // pred_fallthru
      _
    // Predicated region
    $region306: #{tpu_custom_call.1} parent=1 // pred_check
      _
    $region307: #{tpu_custom_call.1} parent=1 // pred_check_branch
      %519 = sbr.rel (0) target = $region309
    $region308: #{tpu_custom_call.1} parent=1 // pred_region
      %520 = vsyncadd %s474, 16
    $region309: #{tpu_custom_call.1} parent=1 // pred_fallthru
      _
    %s521 = sld [smem:[#allocation4 + $0xa]]
    %s522 = scalar_lea.vmem %s1, %s521
    %s523 = scalar_lea.vmem [#allocation2], 10
    %s524 = scalar_lea.sflag [#allocation3], 10
    %p526 = scmp.lt.u32.totalorder 1, 8
    %p527 = pneg %p526
    // Predicated region
    $region310: #{tpu_custom_call.1} parent=1 // pred_check
      _
    $region311: #{tpu_custom_call.1} parent=1 // pred_check_branch
      %529 = sbr.rel (%p526) target = $region313
    $region312: #{tpu_custom_call.1} parent=1 // pred_region
      %s545 = sand.u32 1, 7
      %p546 = scmp.eq.s32.totalorder %s545, 0
      %p547 = pneg %p546
      // Predicated region
      $region325: #{tpu_custom_call.1} parent=312 // pred_check
        _
      $region326: #{tpu_custom_call.1} parent=312 // pred_check_branch
        %549 = sbr.rel (%p546) target = $region328
      $region327: #{tpu_custom_call.1} parent=312 // pred_region
        %s550 = sand.u32 1, 7
        %s551 = ssub.s32 1, %s550
        %s552 = scalar_lea.vmem %s522, %s551
        %s553 = ssub.s32 1, %s550
        %s554 = scalar_lea.vmem %s523, %s553 [#allocation2]
        %s555 = sshll.u32 1, %s550
        %s556 = ssub.s32 %s555, 1
        loop: start=0, step=1, limit=1
        $region329: #{tpu_custom_call.1} parent=327 // loop_pre_header
          _
        $region330: #{tpu_custom_call.1} parent=327 // loop_header
          %s558 = sphi 0, %s562
          %p559 = scmp.ge.s32.totalorder %s558, 1
          %s563 = sphi %s552, %s552
          %s564 = sphi %s554, %s554
        $region331: #{tpu_custom_call.1} parent=327 // loop_header_branch
          %561 = sbr.rel (%p559) target = $region335
        $region332: #{tpu_custom_call.1} parent=327 // loop_body
          %v565 = vld [vmem:[%s563] sm:%s556]
          %566 = vst [vmem:[%s564] sm:%s556] %v565
        $region333: #{tpu_custom_call.1} parent=327 // loop_footer
          %s562 = sadd.s32 1, %s558
        $region334: #{tpu_custom_call.1} parent=327 // loop_footer_branch
          %557 = sbr.rel target = $region330
        $region335: #{tpu_custom_call.1} parent=327 // loop_exit
          _
      $region328: #{tpu_custom_call.1} parent=312 // pred_fallthru
        _
    $region313: #{tpu_custom_call.1} parent=1 // pred_fallthru
      _
    // Predicated region
    $region314: #{tpu_custom_call.1} parent=1 // pred_check
      %p530 = pneg %p526
    $region315: #{tpu_custom_call.1} parent=1 // pred_check_branch
      %532 = sbr.rel (%p530) target = $region317
    $region316: #{tpu_custom_call.1} parent=1 // pred_region
      %s533 = sshll.u32 1, 1
      %s534 = ssub.s32 %s533, 1
      loop: start=0, step=1, limit=1
      $region318: #{tpu_custom_call.1} parent=316 // loop_pre_header
        _
      $region319: #{tpu_custom_call.1} parent=316 // loop_header
        %s536 = sphi 0, %s540
        %p537 = scmp.ge.s32.totalorder %s536, 1
        %s541 = sphi %s522, %s522
        %s542 = sphi %s523, %s523
      $region320: #{tpu_custom_call.1} parent=316 // loop_header_branch
        %539 = sbr.rel (%p537) target = $region324
      $region321: #{tpu_custom_call.1} parent=316 // loop_body
        %v543 = vld [vmem:[%s541] sm:%s534]
        %544 = vst [vmem:[%s542] sm:%s534] %v543
      $region322: #{tpu_custom_call.1} parent=316 // loop_footer
        %s540 = sadd.s32 1, %s536
      $region323: #{tpu_custom_call.1} parent=316 // loop_footer_branch
        %535 = sbr.rel target = $region319
      $region324: #{tpu_custom_call.1} parent=316 // loop_exit
        _
    $region317: #{tpu_custom_call.1} parent=1 // pred_fallthru
      _
    // Predicated region
    $region336: #{tpu_custom_call.1} parent=1 // pred_check
      _
    $region337: #{tpu_custom_call.1} parent=1 // pred_check_branch
      %569 = sbr.rel (0) target = $region339
    $region338: #{tpu_custom_call.1} parent=1 // pred_region
      %570 = vsyncadd %s524, 16
    $region339: #{tpu_custom_call.1} parent=1 // pred_fallthru
      _
    %s571 = sld [smem:[#allocation4 + $0xb]]
    %s572 = scalar_lea.vmem %s1, %s571
    %s573 = scalar_lea.vmem [#allocation2], 11
    %s574 = scalar_lea.sflag [#allocation3], 11
    %p576 = scmp.lt.u32.totalorder 1, 8
    %p577 = pneg %p576
    // Predicated region
    $region340: #{tpu_custom_call.1} parent=1 // pred_check
      _
    $region341: #{tpu_custom_call.1} parent=1 // pred_check_branch
      %579 = sbr.rel (%p576) target = $region343
    $region342: #{tpu_custom_call.1} parent=1 // pred_region
      %s595 = sand.u32 1, 7
      %p596 = scmp.eq.s32.totalorder %s595, 0
      %p597 = pneg %p596
      // Predicated region
      $region355: #{tpu_custom_call.1} parent=342 // pred_check
        _
      $region356: #{tpu_custom_call.1} parent=342 // pred_check_branch
        %599 = sbr.rel (%p596) target = $region358
      $region357: #{tpu_custom_call.1} parent=342 // pred_region
        %s600 = sand.u32 1, 7
        %s601 = ssub.s32 1, %s600
        %s602 = scalar_lea.vmem %s572, %s601
        %s603 = ssub.s32 1, %s600
        %s604 = scalar_lea.vmem %s573, %s603 [#allocation2]
        %s605 = sshll.u32 1, %s600
        %s606 = ssub.s32 %s605, 1
        loop: start=0, step=1, limit=1
        $region359: #{tpu_custom_call.1} parent=357 // loop_pre_header
          _
        $region360: #{tpu_custom_call.1} parent=357 // loop_header
          %s608 = sphi 0, %s612
          %p609 = scmp.ge.s32.totalorder %s608, 1
          %s613 = sphi %s602, %s602
          %s614 = sphi %s604, %s604
        $region361: #{tpu_custom_call.1} parent=357 // loop_header_branch
          %611 = sbr.rel (%p609) target = $region365
        $region362: #{tpu_custom_call.1} parent=357 // loop_body
          %v615 = vld [vmem:[%s613] sm:%s606]
          %616 = vst [vmem:[%s614] sm:%s606] %v615
        $region363: #{tpu_custom_call.1} parent=357 // loop_footer
          %s612 = sadd.s32 1, %s608
        $region364: #{tpu_custom_call.1} parent=357 // loop_footer_branch
          %607 = sbr.rel target = $region360
        $region365: #{tpu_custom_call.1} parent=357 // loop_exit
          _
      $region358: #{tpu_custom_call.1} parent=342 // pred_fallthru
        _
    $region343: #{tpu_custom_call.1} parent=1 // pred_fallthru
      _
    // Predicated region
    $region344: #{tpu_custom_call.1} parent=1 // pred_check
      %p580 = pneg %p576
    $region345: #{tpu_custom_call.1} parent=1 // pred_check_branch
      %582 = sbr.rel (%p580) target = $region347
    $region346: #{tpu_custom_call.1} parent=1 // pred_region
      %s583 = sshll.u32 1, 1
      %s584 = ssub.s32 %s583, 1
      loop: start=0, step=1, limit=1
      $region348: #{tpu_custom_call.1} parent=346 // loop_pre_header
        _
      $region349: #{tpu_custom_call.1} parent=346 // loop_header
        %s586 = sphi 0, %s590
        %p587 = scmp.ge.s32.totalorder %s586, 1
        %s591 = sphi %s572, %s572
        %s592 = sphi %s573, %s573
      $region350: #{tpu_custom_call.1} parent=346 // loop_header_branch
        %589 = sbr.rel (%p587) target = $region354
      $region351: #{tpu_custom_call.1} parent=346 // loop_body
        %v593 = vld [vmem:[%s591] sm:%s584]
        %594 = vst [vmem:[%s592] sm:%s584] %v593
      $region352: #{tpu_custom_call.1} parent=346 // loop_footer
        %s590 = sadd.s32 1, %s586
      $region353: #{tpu_custom_call.1} parent=346 // loop_footer_branch
        %585 = sbr.rel target = $region349
      $region354: #{tpu_custom_call.1} parent=346 // loop_exit
        _
    $region347: #{tpu_custom_call.1} parent=1 // pred_fallthru
      _
    // Predicated region
    $region366: #{tpu_custom_call.1} parent=1 // pred_check
      _
    $region367: #{tpu_custom_call.1} parent=1 // pred_check_branch
      %619 = sbr.rel (0) target = $region369
    $region368: #{tpu_custom_call.1} parent=1 // pred_region
      %620 = vsyncadd %s574, 16
    $region369: #{tpu_custom_call.1} parent=1 // pred_fallthru
      _
    %s621 = sld [smem:[#allocation4 + $0xc]]
    %s622 = scalar_lea.vmem %s1, %s621
    %s623 = scalar_lea.vmem [#allocation2], 12
    %s624 = scalar_lea.sflag [#allocation3], 12
    %p626 = scmp.lt.u32.totalorder 1, 8
    %p627 = pneg %p626
    // Predicated region
    $region370: #{tpu_custom_call.1} parent=1 // pred_check
      _
    $region371: #{tpu_custom_call.1} parent=1 // pred_check_branch
      %629 = sbr.rel (%p626) target = $region373
    $region372: #{tpu_custom_call.1} parent=1 // pred_region
      %s645 = sand.u32 1, 7
      %p646 = scmp.eq.s32.totalorder %s645, 0
      %p647 = pneg %p646
      // Predicated region
      $region385: #{tpu_custom_call.1} parent=372 // pred_check
        _
      $region386: #{tpu_custom_call.1} parent=372 // pred_check_branch
        %649 = sbr.rel (%p646) target = $region388
      $region387: #{tpu_custom_call.1} parent=372 // pred_region
        %s650 = sand.u32 1, 7
        %s651 = ssub.s32 1, %s650
        %s652 = scalar_lea.vmem %s622, %s651
        %s653 = ssub.s32 1, %s650
        %s654 = scalar_lea.vmem %s623, %s653 [#allocation2]
        %s655 = sshll.u32 1, %s650
        %s656 = ssub.s32 %s655, 1
        loop: start=0, step=1, limit=1
        $region389: #{tpu_custom_call.1} parent=387 // loop_pre_header
          _
        $region390: #{tpu_custom_call.1} parent=387 // loop_header
          %s658 = sphi 0, %s662
          %p659 = scmp.ge.s32.totalorder %s658, 1
          %s663 = sphi %s652, %s652
          %s664 = sphi %s654, %s654
        $region391: #{tpu_custom_call.1} parent=387 // loop_header_branch
          %661 = sbr.rel (%p659) target = $region395
        $region392: #{tpu_custom_call.1} parent=387 // loop_body
          %v665 = vld [vmem:[%s663] sm:%s656]
          %666 = vst [vmem:[%s664] sm:%s656] %v665
        $region393: #{tpu_custom_call.1} parent=387 // loop_footer
          %s662 = sadd.s32 1, %s658
        $region394: #{tpu_custom_call.1} parent=387 // loop_footer_branch
          %657 = sbr.rel target = $region390
        $region395: #{tpu_custom_call.1} parent=387 // loop_exit
          _
      $region388: #{tpu_custom_call.1} parent=372 // pred_fallthru
        _
    $region373: #{tpu_custom_call.1} parent=1 // pred_fallthru
      _
    // Predicated region
    $region374: #{tpu_custom_call.1} parent=1 // pred_check
      %p630 = pneg %p626
    $region375: #{tpu_custom_call.1} parent=1 // pred_check_branch
      %632 = sbr.rel (%p630) target = $region377
    $region376: #{tpu_custom_call.1} parent=1 // pred_region
      %s633 = sshll.u32 1, 1
      %s634 = ssub.s32 %s633, 1
      loop: start=0, step=1, limit=1
      $region378: #{tpu_custom_call.1} parent=376 // loop_pre_header
        _
      $region379: #{tpu_custom_call.1} parent=376 // loop_header
        %s636 = sphi 0, %s640
        %p637 = scmp.ge.s32.totalorder %s636, 1
        %s641 = sphi %s622, %s622
        %s642 = sphi %s623, %s623
      $region380: #{tpu_custom_call.1} parent=376 // loop_header_branch
        %639 = sbr.rel (%p637) target = $region384
      $region381: #{tpu_custom_call.1} parent=376 // loop_body
        %v643 = vld [vmem:[%s641] sm:%s634]
        %644 = vst [vmem:[%s642] sm:%s634] %v643
      $region382: #{tpu_custom_call.1} parent=376 // loop_footer
        %s640 = sadd.s32 1, %s636
      $region383: #{tpu_custom_call.1} parent=376 // loop_footer_branch
        %635 = sbr.rel target = $region379
      $region384: #{tpu_custom_call.1} parent=376 // loop_exit
        _
    $region377: #{tpu_custom_call.1} parent=1 // pred_fallthru
      _
    // Predicated region
    $region396: #{tpu_custom_call.1} parent=1 // pred_check
      _
    $region397: #{tpu_custom_call.1} parent=1 // pred_check_branch
      %669 = sbr.rel (0) target = $region399
    $region398: #{tpu_custom_call.1} parent=1 // pred_region
      %670 = vsyncadd %s624, 16
    $region399: #{tpu_custom_call.1} parent=1 // pred_fallthru
      _
    %s671 = sld [smem:[#allocation4 + $0xd]]
    %s672 = scalar_lea.vmem %s1, %s671
    %s673 = scalar_lea.vmem [#allocation2], 13
    %s674 = scalar_lea.sflag [#allocation3], 13
    %p676 = scmp.lt.u32.totalorder 1, 8
    %p677 = pneg %p676
    // Predicated region
    $region400: #{tpu_custom_call.1} parent=1 // pred_check
      _
    $region401: #{tpu_custom_call.1} parent=1 // pred_check_branch
      %679 = sbr.rel (%p676) target = $region403
    $region402: #{tpu_custom_call.1} parent=1 // pred_region
      %s695 = sand.u32 1, 7
      %p696 = scmp.eq.s32.totalorder %s695, 0
      %p697 = pneg %p696
      // Predicated region
      $region415: #{tpu_custom_call.1} parent=402 // pred_check
        _
      $region416: #{tpu_custom_call.1} parent=402 // pred_check_branch
        %699 = sbr.rel (%p696) target = $region418
      $region417: #{tpu_custom_call.1} parent=402 // pred_region
        %s700 = sand.u32 1, 7
        %s701 = ssub.s32 1, %s700
        %s702 = scalar_lea.vmem %s672, %s701
        %s703 = ssub.s32 1, %s700
        %s704 = scalar_lea.vmem %s673, %s703 [#allocation2]
        %s705 = sshll.u32 1, %s700
        %s706 = ssub.s32 %s705, 1
        loop: start=0, step=1, limit=1
        $region419: #{tpu_custom_call.1} parent=417 // loop_pre_header
          _
        $region420: #{tpu_custom_call.1} parent=417 // loop_header
          %s708 = sphi 0, %s712
          %p709 = scmp.ge.s32.totalorder %s708, 1
          %s713 = sphi %s702, %s702
          %s714 = sphi %s704, %s704
        $region421: #{tpu_custom_call.1} parent=417 // loop_header_branch
          %711 = sbr.rel (%p709) target = $region425
        $region422: #{tpu_custom_call.1} parent=417 // loop_body
          %v715 = vld [vmem:[%s713] sm:%s706]
          %716 = vst [vmem:[%s714] sm:%s706] %v715
        $region423: #{tpu_custom_call.1} parent=417 // loop_footer
          %s712 = sadd.s32 1, %s708
        $region424: #{tpu_custom_call.1} parent=417 // loop_footer_branch
          %707 = sbr.rel target = $region420
        $region425: #{tpu_custom_call.1} parent=417 // loop_exit
          _
      $region418: #{tpu_custom_call.1} parent=402 // pred_fallthru
        _
    $region403: #{tpu_custom_call.1} parent=1 // pred_fallthru
      _
    // Predicated region
    $region404: #{tpu_custom_call.1} parent=1 // pred_check
      %p680 = pneg %p676
    $region405: #{tpu_custom_call.1} parent=1 // pred_check_branch
      %682 = sbr.rel (%p680) target = $region407
    $region406: #{tpu_custom_call.1} parent=1 // pred_region
      %s683 = sshll.u32 1, 1
      %s684 = ssub.s32 %s683, 1
      loop: start=0, step=1, limit=1
      $region408: #{tpu_custom_call.1} parent=406 // loop_pre_header
        _
      $region409: #{tpu_custom_call.1} parent=406 // loop_header
        %s686 = sphi 0, %s690
        %p687 = scmp.ge.s32.totalorder %s686, 1
        %s691 = sphi %s672, %s672
        %s692 = sphi %s673, %s673
      $region410: #{tpu_custom_call.1} parent=406 // loop_header_branch
        %689 = sbr.rel (%p687) target = $region414
      $region411: #{tpu_custom_call.1} parent=406 // loop_body
        %v693 = vld [vmem:[%s691] sm:%s684]
        %694 = vst [vmem:[%s692] sm:%s684] %v693
      $region412: #{tpu_custom_call.1} parent=406 // loop_footer
        %s690 = sadd.s32 1, %s686
      $region413: #{tpu_custom_call.1} parent=406 // loop_footer_branch
        %685 = sbr.rel target = $region409
      $region414: #{tpu_custom_call.1} parent=406 // loop_exit
        _
    $region407: #{tpu_custom_call.1} parent=1 // pred_fallthru
      _
    // Predicated region
    $region426: #{tpu_custom_call.1} parent=1 // pred_check
      _
    $region427: #{tpu_custom_call.1} parent=1 // pred_check_branch
      %719 = sbr.rel (0) target = $region429
    $region428: #{tpu_custom_call.1} parent=1 // pred_region
      %720 = vsyncadd %s674, 16
    $region429: #{tpu_custom_call.1} parent=1 // pred_fallthru
      _
    %s721 = sld [smem:[#allocation4 + $0xe]]
    %s722 = scalar_lea.vmem %s1, %s721
    %s723 = scalar_lea.vmem [#allocation2], 14
    %s724 = scalar_lea.sflag [#allocation3], 14
    %p726 = scmp.lt.u32.totalorder 1, 8
    %p727 = pneg %p726
    // Predicated region
    $region430: #{tpu_custom_call.1} parent=1 // pred_check
      _
    $region431: #{tpu_custom_call.1} parent=1 // pred_check_branch
      %729 = sbr.rel (%p726) target = $region433
    $region432: #{tpu_custom_call.1} parent=1 // pred_region
      %s745 = sand.u32 1, 7
      %p746 = scmp.eq.s32.totalorder %s745, 0
      %p747 = pneg %p746
      // Predicated region
      $region445: #{tpu_custom_call.1} parent=432 // pred_check
        _
      $region446: #{tpu_custom_call.1} parent=432 // pred_check_branch
        %749 = sbr.rel (%p746) target = $region448
      $region447: #{tpu_custom_call.1} parent=432 // pred_region
        %s750 = sand.u32 1, 7
        %s751 = ssub.s32 1, %s750
        %s752 = scalar_lea.vmem %s722, %s751
        %s753 = ssub.s32 1, %s750
        %s754 = scalar_lea.vmem %s723, %s753 [#allocation2]
        %s755 = sshll.u32 1, %s750
        %s756 = ssub.s32 %s755, 1
        loop: start=0, step=1, limit=1
        $region449: #{tpu_custom_call.1} parent=447 // loop_pre_header
          _
        $region450: #{tpu_custom_call.1} parent=447 // loop_header
          %s758 = sphi 0, %s762
          %p759 = scmp.ge.s32.totalorder %s758, 1
          %s763 = sphi %s752, %s752
          %s764 = sphi %s754, %s754
        $region451: #{tpu_custom_call.1} parent=447 // loop_header_branch
          %761 = sbr.rel (%p759) target = $region455
        $region452: #{tpu_custom_call.1} parent=447 // loop_body
          %v765 = vld [vmem:[%s763] sm:%s756]
          %766 = vst [vmem:[%s764] sm:%s756] %v765
        $region453: #{tpu_custom_call.1} parent=447 // loop_footer
          %s762 = sadd.s32 1, %s758
        $region454: #{tpu_custom_call.1} parent=447 // loop_footer_branch
          %757 = sbr.rel target = $region450
        $region455: #{tpu_custom_call.1} parent=447 // loop_exit
          _
      $region448: #{tpu_custom_call.1} parent=432 // pred_fallthru
        _
    $region433: #{tpu_custom_call.1} parent=1 // pred_fallthru
      _
    // Predicated region
    $region434: #{tpu_custom_call.1} parent=1 // pred_check
      %p730 = pneg %p726
    $region435: #{tpu_custom_call.1} parent=1 // pred_check_branch
      %732 = sbr.rel (%p730) target = $region437
    $region436: #{tpu_custom_call.1} parent=1 // pred_region
      %s733 = sshll.u32 1, 1
      %s734 = ssub.s32 %s733, 1
      loop: start=0, step=1, limit=1
      $region438: #{tpu_custom_call.1} parent=436 // loop_pre_header
        _
      $region439: #{tpu_custom_call.1} parent=436 // loop_header
        %s736 = sphi 0, %s740
        %p737 = scmp.ge.s32.totalorder %s736, 1
        %s741 = sphi %s722, %s722
        %s742 = sphi %s723, %s723
      $region440: #{tpu_custom_call.1} parent=436 // loop_header_branch
        %739 = sbr.rel (%p737) target = $region444
      $region441: #{tpu_custom_call.1} parent=436 // loop_body
        %v743 = vld [vmem:[%s741] sm:%s734]
        %744 = vst [vmem:[%s742] sm:%s734] %v743
      $region442: #{tpu_custom_call.1} parent=436 // loop_footer
        %s740 = sadd.s32 1, %s736
      $region443: #{tpu_custom_call.1} parent=436 // loop_footer_branch
        %735 = sbr.rel target = $region439
      $region444: #{tpu_custom_call.1} parent=436 // loop_exit
        _
    $region437: #{tpu_custom_call.1} parent=1 // pred_fallthru
      _
    // Predicated region
    $region456: #{tpu_custom_call.1} parent=1 // pred_check
      _
    $region457: #{tpu_custom_call.1} parent=1 // pred_check_branch
      %769 = sbr.rel (0) target = $region459
    $region458: #{tpu_custom_call.1} parent=1 // pred_region
      %770 = vsyncadd %s724, 16
    $region459: #{tpu_custom_call.1} parent=1 // pred_fallthru
      _
    %s771 = sld [smem:[#allocation4 + $0xf]]
    %s772 = scalar_lea.vmem %s1, %s771
    %s773 = scalar_lea.vmem [#allocation2], 15
    %s774 = scalar_lea.sflag [#allocation3], 15
    %p776 = scmp.lt.u32.totalorder 1, 8
    %p777 = pneg %p776
    // Predicated region
    $region460: #{tpu_custom_call.1} parent=1 // pred_check
      _
    $region461: #{tpu_custom_call.1} parent=1 // pred_check_branch
      %779 = sbr.rel (%p776) target = $region463
    $region462: #{tpu_custom_call.1} parent=1 // pred_region
      %s795 = sand.u32 1, 7
      %p796 = scmp.eq.s32.totalorder %s795, 0
      %p797 = pneg %p796
      // Predicated region
      $region475: #{tpu_custom_call.1} parent=462 // pred_check
        _
      $region476: #{tpu_custom_call.1} parent=462 // pred_check_branch
        %799 = sbr.rel (%p796) target = $region478
      $region477: #{tpu_custom_call.1} parent=462 // pred_region
        %s800 = sand.u32 1, 7
        %s801 = ssub.s32 1, %s800
        %s802 = scalar_lea.vmem %s772, %s801
        %s803 = ssub.s32 1, %s800
        %s804 = scalar_lea.vmem %s773, %s803 [#allocation2]
        %s805 = sshll.u32 1, %s800
        %s806 = ssub.s32 %s805, 1
        loop: start=0, step=1, limit=1
        $region479: #{tpu_custom_call.1} parent=477 // loop_pre_header
          _
        $region480: #{tpu_custom_call.1} parent=477 // loop_header
          %s808 = sphi 0, %s812
          %p809 = scmp.ge.s32.totalorder %s808, 1
          %s813 = sphi %s802, %s802
          %s814 = sphi %s804, %s804
        $region481: #{tpu_custom_call.1} parent=477 // loop_header_branch
          %811 = sbr.rel (%p809) target = $region485
        $region482: #{tpu_custom_call.1} parent=477 // loop_body
          %v815 = vld [vmem:[%s813] sm:%s806]
          %816 = vst [vmem:[%s814] sm:%s806] %v815
        $region483: #{tpu_custom_call.1} parent=477 // loop_footer
          %s812 = sadd.s32 1, %s808
        $region484: #{tpu_custom_call.1} parent=477 // loop_footer_branch
          %807 = sbr.rel target = $region480
        $region485: #{tpu_custom_call.1} parent=477 // loop_exit
          _
      $region478: #{tpu_custom_call.1} parent=462 // pred_fallthru
        _
    $region463: #{tpu_custom_call.1} parent=1 // pred_fallthru
      _
    // Predicated region
    $region464: #{tpu_custom_call.1} parent=1 // pred_check
      %p780 = pneg %p776
    $region465: #{tpu_custom_call.1} parent=1 // pred_check_branch
      %782 = sbr.rel (%p780) target = $region467
    $region466: #{tpu_custom_call.1} parent=1 // pred_region
      %s783 = sshll.u32 1, 1
      %s784 = ssub.s32 %s783, 1
      loop: start=0, step=1, limit=1
      $region468: #{tpu_custom_call.1} parent=466 // loop_pre_header
        _
      $region469: #{tpu_custom_call.1} parent=466 // loop_header
        %s786 = sphi 0, %s790
        %p787 = scmp.ge.s32.totalorder %s786, 1
        %s791 = sphi %s772, %s772
        %s792 = sphi %s773, %s773
      $region470: #{tpu_custom_call.1} parent=466 // loop_header_branch
        %789 = sbr.rel (%p787) target = $region474
      $region471: #{tpu_custom_call.1} parent=466 // loop_body
        %v793 = vld [vmem:[%s791] sm:%s784]
        %794 = vst [vmem:[%s792] sm:%s784] %v793
      $region472: #{tpu_custom_call.1} parent=466 // loop_footer
        %s790 = sadd.s32 1, %s786
      $region473: #{tpu_custom_call.1} parent=466 // loop_footer_branch
        %785 = sbr.rel target = $region469
      $region474: #{tpu_custom_call.1} parent=466 // loop_exit
        _
    $region467: #{tpu_custom_call.1} parent=1 // pred_fallthru
      _
    // Predicated region
    $region486: #{tpu_custom_call.1} parent=1 // pred_check
      _
    $region487: #{tpu_custom_call.1} parent=1 // pred_check_branch
      %819 = sbr.rel (0) target = $region489
    $region488: #{tpu_custom_call.1} parent=1 // pred_region
      %820 = vsyncadd %s774, 16
    $region489: #{tpu_custom_call.1} parent=1 // pred_fallthru
      _
    %s821 = smul.u32 1, 1
    %s822 = sshll.u32 %s821, 4
    %823 = dma.done [#allocation3], %s822
    %s824 = sshll.u32 %s821, 4
    %825 = dma.done %s74, %s824
    %s826 = sshll.u32 %s821, 4
    %827 = dma.done %s124, %s826
    %s828 = sshll.u32 %s821, 4
    %829 = dma.done %s174, %s828
    %s830 = sshll.u32 %s821, 4
    %831 = dma.done %s224, %s830
    %s832 = sshll.u32 %s821, 4
    %833 = dma.done %s274, %s832
    %s834 = sshll.u32 %s821, 4
    %835 = dma.done %s324, %s834
    %s836 = sshll.u32 %s821, 4
    %837 = dma.done %s374, %s836
    %s838 = sshll.u32 %s821, 4
    %839 = dma.done %s424, %s838
    %s840 = sshll.u32 %s821, 4
    %841 = dma.done %s474, %s840
    %s842 = sshll.u32 %s821, 4
    %843 = dma.done %s524, %s842
    %s844 = sshll.u32 %s821, 4
    %845 = dma.done %s574, %s844
    %s846 = sshll.u32 %s821, 4
    %847 = dma.done %s624, %s846
    %s848 = sshll.u32 %s821, 4
    %849 = dma.done %s674, %s848
    %s850 = sshll.u32 %s821, 4
    %851 = dma.done %s724, %s850
    %s852 = sshll.u32 %s821, 4
    %853 = dma.done %s774, %s852
    %v854 = vld [vmem:[#allocation2] sm:$0xff]
    %v855 = vld [vmem:[#allocation2 + $0x8] sm:$0xff]
    %v856 = vmul.f32 %v854, %v854
    %v857 = vmul.f32 %v855, %v855
    %vm858 = vcmask 261120
    %v859 = vsel %vm858, %v856, 0.0
    %860 = vadd.xlane.f32.xlu0 %v859
    %v861 = vpop.xlane.xlu0 %860
    %v862 = vsel %vm858, %v857, 0.0
    %863 = vadd.xlane.f32.xlu0 %v862
    %v864 = vpop.xlane.xlu0 %863
    %v865 = vmax.f32 %v861, 1e-24
    %v866 = vmax.f32 %v864, 1e-24
    %v867 = vrsqrt.pop %v865
    %v868 = vrsqrt.pop %v866
    %v869 = vmul.f32 %v854, %v867
    %v870 = vmul.f32 %v855, %v868
    %871 = vst.msk [vmem:[#allocation7] sm:$0xff] %vm858, %v869
    %872 = vst.msk [vmem:[#allocation7 + $0x8] sm:$0xff] %vm858, %v870
    // Predicated region
    $region490: #{tpu_custom_call.1} parent=1 // pred_check
      _
    $region491: #{tpu_custom_call.1} parent=1 // pred_check_branch
      %874 = sbr.rel (0) target = $region493
    $region492: #{tpu_custom_call.1} parent=1 // pred_region
      %s876 = ssub.s32 256, 256
      %877 = vsyncadd [#allocation5], %s876
      %s878 = sshll.u32 [#allocation7], 4
      %s879 = int_to_ptr.vmem [resolvable:$true] %s878
      %884 = dma.vmem_to_hbm [thread:$0]  %s879, 256, %s2, [#allocation5], 128, 128, 8
    $region493: #{tpu_custom_call.1} parent=1 // pred_fallthru
      _
    // Predicated region
    $region494: #{tpu_custom_call.1} parent=1 // pred_check
      _
    $region495: #{tpu_custom_call.1} parent=1 // pred_check_branch
      %886 = sbr.rel (0) target = $region497
    $region496: #{tpu_custom_call.1} parent=1 // pred_region
      %887 = dma.done [#allocation5], 256
    $region497: #{tpu_custom_call.1} parent=1 // pred_fallthru
      _
    %888 = vsyncpa [#allocation5], 1
    %889 = vsyncpa [#allocation6], 1
  %890 = vsyncmov [#allocation3]
  %s891 = vpop.sfrf %890
  %p892 = scmp.eq.s32.totalorder %s891, 0
  %p893 = pneg %p892
  %895 = shalt.err (%p893)
  %s896 = scalar_lea.sflag [#allocation3], 1
  %897 = vsyncmov %s896
  %s898 = vpop.sfrf %897
  %p899 = scmp.eq.s32.totalorder %s898, 0
  %p900 = pneg %p899
  %902 = shalt.err (%p900)
  %s903 = scalar_lea.sflag [#allocation3], 2
  %904 = vsyncmov %s903
  %s905 = vpop.sfrf %904
  %p906 = scmp.eq.s32.totalorder %s905, 0
  %p907 = pneg %p906
  %909 = shalt.err (%p907)
  %s910 = scalar_lea.sflag [#allocation3], 3
  %911 = vsyncmov %s910
  %s912 = vpop.sfrf %911
  %p913 = scmp.eq.s32.totalorder %s912, 0
  %p914 = pneg %p913
  %916 = shalt.err (%p914)
  %s917 = scalar_lea.sflag [#allocation3], 4
  %918 = vsyncmov %s917
  %s919 = vpop.sfrf %918
  %p920 = scmp.eq.s32.totalorder %s919, 0
  %p921 = pneg %p920
  %923 = shalt.err (%p921)
  %s924 = scalar_lea.sflag [#allocation3], 5
  %925 = vsyncmov %s924
  %s926 = vpop.sfrf %925
  %p927 = scmp.eq.s32.totalorder %s926, 0
  %p928 = pneg %p927
  %930 = shalt.err (%p928)
  %s931 = scalar_lea.sflag [#allocation3], 6
  %932 = vsyncmov %s931
  %s933 = vpop.sfrf %932
  %p934 = scmp.eq.s32.totalorder %s933, 0
  %p935 = pneg %p934
  %937 = shalt.err (%p935)
  %s938 = scalar_lea.sflag [#allocation3], 7
  %939 = vsyncmov %s938
  %s940 = vpop.sfrf %939
  %p941 = scmp.eq.s32.totalorder %s940, 0
  %p942 = pneg %p941
  %944 = shalt.err (%p942)
  %s945 = scalar_lea.sflag [#allocation3], 8
  %946 = vsyncmov %s945
  %s947 = vpop.sfrf %946
  %p948 = scmp.eq.s32.totalorder %s947, 0
  %p949 = pneg %p948
  %951 = shalt.err (%p949)
  %s952 = scalar_lea.sflag [#allocation3], 9
  %953 = vsyncmov %s952
  %s954 = vpop.sfrf %953
  %p955 = scmp.eq.s32.totalorder %s954, 0
  %p956 = pneg %p955
  %958 = shalt.err (%p956)
  %s959 = scalar_lea.sflag [#allocation3], 10
  %960 = vsyncmov %s959
  %s961 = vpop.sfrf %960
  %p962 = scmp.eq.s32.totalorder %s961, 0
  %p963 = pneg %p962
  %965 = shalt.err (%p963)
  %s966 = scalar_lea.sflag [#allocation3], 11
  %967 = vsyncmov %s966
  %s968 = vpop.sfrf %967
  %p969 = scmp.eq.s32.totalorder %s968, 0
  %p970 = pneg %p969
  %972 = shalt.err (%p970)
  %s973 = scalar_lea.sflag [#allocation3], 12
  %974 = vsyncmov %s973
  %s975 = vpop.sfrf %974
  %p976 = scmp.eq.s32.totalorder %s975, 0
  %p977 = pneg %p976
  %979 = shalt.err (%p977)
  %s980 = scalar_lea.sflag [#allocation3], 13
  %981 = vsyncmov %s980
  %s982 = vpop.sfrf %981
  %p983 = scmp.eq.s32.totalorder %s982, 0
  %p984 = pneg %p983
  %986 = shalt.err (%p984)
  %s987 = scalar_lea.sflag [#allocation3], 14
  %988 = vsyncmov %s987
  %s989 = vpop.sfrf %988
  %p990 = scmp.eq.s32.totalorder %s989, 0
  %p991 = pneg %p990
  %993 = shalt.err (%p991)
  %s994 = scalar_lea.sflag [#allocation3], 15
  %995 = vsyncmov %s994
  %s996 = vpop.sfrf %995
  %p997 = scmp.eq.s32.totalorder %s996, 0
  %p998 = pneg %p997
  %1000 = shalt.err (%p998)

</llo_original>
